<compile_context>
chip_gen: v6e
topology: v6e:2x2x1
jax: 0.10.0
libtpu: 0.0.40
codegen_flags: <defaults>
</compile_context>

<pallas_src>
import functools

import jax
import jax.numpy as jnp
import numpy as np
from jax import lax
from jax.experimental import pallas as pl
from jax.experimental.pallas import tpu as pltpu

BN_EPS = 1e-5


def _round_up(x, m):
    return (x + m - 1) // m * m


def _group_bottleneck_kernel(x_ref, m_ref, w1_ref, b1_ref, w2_ref, b2_ref,
                             w3_ref, b3_ref, out_ref, pad_ref, *, H, W, B):
    """B images per grid step, channels-in-sublanes / (batch*spatial)-in-lanes.

    x_ref  : (B, Cin, H*W)   f32   residual-path input, Cin == 2*planes
    m_ref  : (9, B*H*W)      bf16  {0,1} validity mask per 3x3 tap
    w1_ref : (P, Cin)        bf16  conv1 1x1 weight (bn1 scale folded in)
    b1_ref : (P, 1)          f32
    w2_ref : (9, P, P)       bf16  grouped 3x3 conv as per-tap block-diag weights
    b2_ref : (P, 1)          f32
    w3_ref : (2P, P)         bf16  conv3 1x1 weight (bn3 scale folded in)
    b3_ref : (2P, 1)         f32
    out_ref: (B, 2P, H*W)    f32
    pad_ref: (P, PAD + B*H*W + HALO) bf16  zero-haloed staging scratch for h1
    """
    HW = H * W
    BHW = B * HW
    P = w1_ref.shape[0]
    HALO = W + 1                       # max |flat shift| of any 3x3 tap
    PAD = _round_up(HALO, 128)         # data starts lane-aligned in the scratch

    # Lane-concatenate the B images of this step: (Cin, B*HW), kept f32 for the
    # residual add.  HW is a multiple of 128, so the concat offsets are aligned.
    if B == 1:
        x = x_ref[0]
    else:
        x = jnp.concatenate([x_ref[b] for b in range(B)], axis=-1)

    # ---- conv1 (1x1) + bn1 + relu  (single lane-dense matmul) ---------------
    h1 = jnp.dot(w1_ref[...], x.astype(jnp.bfloat16),
                 preferred_element_type=jnp.float32)
    h1 = jnp.maximum(h1 + b1_ref[...], 0.0)            # (P, BHW) f32
    h1_bf = h1.astype(jnp.bfloat16)

    # ---- stage h1 (bf16) into the flat zero-haloed scratch ------------------
    # Only the two HALO strips are zeroed, and they are re-zeroed EVERY step:
    # with "parallel" dimension_semantics each core owns its own scratch, so a
    # pl.when(step == 0) guard would leave stale VMEM on the other core.
    zeros_halo = jnp.zeros((P, HALO), jnp.bfloat16)
    pad_ref[:, PAD - HALO:PAD] = zeros_halo
    pad_ref[:, PAD + BHW:PAD + BHW + HALO] = zeros_halo
    pad_ref[:, PAD:PAD + BHW] = h1_bf                   # lane-aligned store

    # ---- conv2 (grouped 3x3, block-diag weight): 9 accumulated matmuls ------
    # Tap k = (dy+1)*3 + (dx+1).  The bf16 mask row zeroes taps that fall
    # outside the image (pad=1 zeros) or into a neighbouring image of the lane
    # concatenation.  No (9P, BHW) patch is materialized.
    h2 = None
    k = 0
    for dy in (-1, 0, 1):
        for dx in (-1, 0, 1):
            d = dy * W + dx
            if d == 0:
                tap = h1_bf                              # centre tap: always valid
            else:
                start = PAD + d                          # static slice
                tap = pad_ref[:, start:start + BHW] * m_ref[k:k + 1, :]
            part = jnp.dot(w2_ref[k], tap, preferred_element_type=jnp.float32)
            h2 = part if h2 is None else h2 + part
            k += 1
    h2 = jnp.maximum(h2 + b2_ref[...], 0.0)              # (P, BHW) f32

    # ---- conv3 (1x1) + bn3 + residual + relu --------------------------------
    h3 = jnp.dot(w3_ref[...], h2.astype(jnp.bfloat16),
                 preferred_element_type=jnp.float32)     # (2P, BHW) f32
    out = jnp.maximum(h3 + b3_ref[...] + x, 0.0)

    # Per-image lane-dense stores (slices start at multiples of HW, i.e. x128).
    for b in range(B):
        out_ref[b] = out[:, b * HW:(b + 1) * HW].astype(out_ref.dtype)


def _fold_bn(gamma, beta, mean, var):
    scale = gamma / jnp.sqrt(var + BN_EPS)
    bias = beta - mean * scale
    return scale, bias


def _tap_masks(H, W, B):
    """{0,1} validity mask per 3x3 tap, tiled over the B lane-concat images."""
    ys, xs = np.meshgrid(np.arange(H), np.arange(W), indexing="ij")
    rows = []
    for dy in (-1, 0, 1):
        for dx in (-1, 0, 1):
            m = np.ones((H, W), np.float32)
            if dy == -1:
                m = m * (ys >= 1)
            elif dy == 1:
                m = m * (ys <= H - 2)
            if dx == -1:
                m = m * (xs >= 1)
            elif dx == 1:
                m = m * (xs <= W - 2)
            rows.append(m.reshape(-1))
    masks = np.stack(rows, axis=0)              # (9, HW)
    return np.tile(masks, (1, B))               # (9, B*HW)


def _vmem_bytes(B, Cin, P, HW, W):
    """Rough per-step VMEM footprint (bytes) for batch-size selection."""
    bhw = B * HW
    halo = W + 1
    pad_lanes = _round_up(halo, 128) + bhw + halo
    x_blk = 2 * B * Cin * HW * 4                # double-buffered input blocks
    o_blk = 2 * B * 2 * P * HW * 4              # double-buffered output blocks
    consts = (P * Cin + 9 * P * P + 2 * P * P + 9 * bhw) * 2 + 4 * P * 4
    scratch = P * pad_lanes * 2                 # bf16 staging scratch
    live = (Cin + 4 * P) * bhw * 4              # f32 working set (x, h1, h2, out)
    return x_blk + o_blk + consts + scratch + live


def _pick_batch(N, Cin, P, HW, W, budget_bytes=36 * 1024 * 1024):
    """Largest B dividing N that fits the VMEM budget and keeps >=2 grid steps."""
    best = 1
    for B in range(1, N + 1):
        if N % B:
            continue
        if N >= 2 and N // B < 2:
            continue                            # keep both v7x TensorCores busy
        if _vmem_bytes(B, Cin, P, HW, W) <= budget_bytes:
            best = B
    return best


@functools.partial(jax.jit, static_argnums=(2,))
def group_bottleneck_forward(x_nchw, params, groups):
    """GroupBottleneck forward (stride=1, downsample=None, eval-mode BN).

    x_nchw: (N, Cin, H, W) float32 with Cin == 2 * planes.
    """
    w1_pt, w2_pt, w3_pt, bn1, bn2, bn3 = params
    N, Cin, H, W = x_nchw.shape
    P = w1_pt.shape[0]                   # planes
    G = groups
    Cg = w2_pt.shape[1]                  # conv2 in-channels per group
    Pg = P // G
    HW = H * W

    # Guard the configuration this kernel implements (see module spec).
    assert Cin == 2 * P, "downsample=None requires inplanes == 2 * planes"
    assert P % G == 0 and Cg == P // G, "invalid grouped-conv configuration"
    assert w2_pt.shape == (P, Cg, 3, 3)
    assert w1_pt.shape == (P, Cin, 1, 1) and w3_pt.shape == (2 * P, P, 1, 1)
    assert H >= 2 and W >= 2

    s1, b1 = _fold_bn(*bn1)
    s2, b2 = _fold_bn(*bn2)
    s3, b3 = _fold_bn(*bn3)

    # Fold BN scales into the conv weights (tiny one-time weight transform).
    w1 = (w1_pt[:, :, 0, 0] * s1[:, None]).astype(jnp.bfloat16)       # (P, Cin)
    w3 = (w3_pt[:, :, 0, 0] * s3[:, None]).astype(jnp.bfloat16)       # (2P, P)

    # Grouped 3x3 conv -> per-tap block-diagonal weights (9, P, P); tap index
    # k = ky*3 + kx, zero outside the channel group.
    w2_r = jnp.transpose(w2_pt, (0, 2, 3, 1)).reshape(P, 9, Cg)        # (P, 9, Cg)
    w2_full = jnp.zeros((P, 9, P), jnp.float32)
    for g in range(G):
        w2_full = w2_full.at[g * Pg:(g + 1) * Pg, :, g * Cg:(g + 1) * Cg].set(
            w2_r[g * Pg:(g + 1) * Pg])
    w2 = jnp.transpose(w2_full * s2[:, None, None], (1, 0, 2)).astype(jnp.bfloat16)

    b1 = b1.reshape(P, 1).astype(jnp.float32)
    b2 = b2.reshape(P, 1).astype(jnp.float32)
    b3 = b3.reshape(2 * P, 1).astype(jnp.float32)

    # NCHW accepted directly; contiguity-preserving reshape, no transpose.
    x3d = x_nchw.reshape(N, Cin, HW)

    # Batch B images per grid step; lane width per conv = B*HW (x128 here).
    B = _pick_batch(N, Cin, P, HW, W)
    BHW = B * HW
    masks = jnp.asarray(_tap_masks(H, W, B), jnp.bfloat16)             # (9, BHW)

    halo = W + 1
    pad_lanes = _round_up(halo, 128) + BHW + halo
    vmem_limit = int(min(max(2 * _vmem_bytes(B, Cin, P, HW, W),
                             32 * 1024 * 1024), 48 * 1024 * 1024))

    kernel = functools.partial(_group_bottleneck_kernel, H=H, W=W, B=B)
    out3d = pl.pallas_call(
        kernel,
        out_shape=jax.ShapeDtypeStruct((N, 2 * P, HW), jnp.float32),
        grid=(N // B,),
        in_specs=[
            pl.BlockSpec((B, Cin, HW), lambda n: (n, 0, 0)),
            # Grid-invariant operands: single-buffered (no double-buffer waste).
            pl.BlockSpec((9, BHW), lambda n: (0, 0),
                         pipeline_mode=pl.Buffered(1)),
            pl.BlockSpec((P, Cin), lambda n: (0, 0),
                         pipeline_mode=pl.Buffered(1)),
            pl.BlockSpec((P, 1), lambda n: (0, 0),
                         pipeline_mode=pl.Buffered(1)),
            pl.BlockSpec((9, P, P), lambda n: (0, 0, 0),
                         pipeline_mode=pl.Buffered(1)),
            pl.BlockSpec((P, 1), lambda n: (0, 0),
                         pipeline_mode=pl.Buffered(1)),
            pl.BlockSpec((2 * P, P), lambda n: (0, 0),
                         pipeline_mode=pl.Buffered(1)),
            pl.BlockSpec((2 * P, 1), lambda n: (0, 0),
                         pipeline_mode=pl.Buffered(1)),
        ],
        out_specs=pl.BlockSpec((B, 2 * P, HW), lambda n: (n, 0, 0)),
        scratch_shapes=[pltpu.VMEM((P, pad_lanes), jnp.bfloat16)],
        compiler_params=pltpu.CompilerParams(
            dimension_semantics=("parallel",),
            vmem_limit_bytes=vmem_limit),
    )(x3d, masks, w1, b1, w2, b2, w3, b3)

    return out3d.reshape(N, 2 * P, H, W)


# ------------------------- pure-JAX f32 reference ---------------------------
def reference_forward(x, params, groups):
    (w1_pt, w2_pt, w3_pt, bn1, bn2, bn3) = params

    def bn(y, p):
        g, b, m, v = p
        sh = (1, -1, 1, 1)
        return (y - m.reshape(sh)) / jnp.sqrt(v.reshape(sh) + BN_EPS) * \
            g.reshape(sh) + b.reshape(sh)

    dn = ('NCHW', 'OIHW', 'NCHW')
    out = lax.conv_general_dilated(x, w1_pt, (1, 1), 'VALID',
                                   dimension_numbers=dn)
    out = jnp.maximum(bn(out, bn1), 0.0)
    out = lax.conv_general_dilated(out, w2_pt, (1, 1), ((1, 1), (1, 1)),
                                   dimension_numbers=dn,
                                   feature_group_count=groups)
    out = jnp.maximum(bn(out, bn2), 0.0)
    out = lax.conv_general_dilated(out, w3_pt, (1, 1), 'VALID',
                                   dimension_numbers=dn)
    out = bn(out, bn3)
    return jnp.maximum(out + x, 0.0)


if __name__ == "__main__":
    # GroupBottleneck(inplanes=16, planes=8, stride=1, groups=2, downsample=None)
    N, H, W = 4, 16, 16
    planes = 8
    groups = 2
    inplanes = 2 * planes          # required when downsample is None
    Cg = planes // groups

    key = jax.random.PRNGKey(0)
    ks = jax.random.split(key, 8)

    # Conv weights in PyTorch layout (OIHW), deterministic init.
    w1_pt = 0.1 * jax.random.normal(ks[0], (planes, inplanes, 1, 1), jnp.float32)
    w2_pt = 0.1 * jax.random.normal(ks[1], (planes, Cg, 3, 3), jnp.float32)
    w3_pt = 0.1 * jax.random.normal(ks[2], (2 * planes, planes, 1, 1), jnp.float32)

    def bn_params(k, c):
        k1, k2, k3, k4 = jax.random.split(k, 4)
        gamma = 1.0 + 0.1 * jax.random.normal(k1, (c,), jnp.float32)
        beta = 0.1 * jax.random.normal(k2, (c,), jnp.float32)
        mean = 0.05 * jax.random.normal(k3, (c,), jnp.float32)
        var = 1.0 + 0.1 * jnp.abs(jax.random.normal(k4, (c,), jnp.float32))
        return (gamma, beta, mean, var)

    bn1 = bn_params(ks[3], planes)
    bn2 = bn_params(ks[4], planes)
    bn3 = bn_params(ks[5], 2 * planes)
    params = (w1_pt, w2_pt, w3_pt, bn1, bn2, bn3)

    x = jax.random.normal(ks[6], (N, inplanes, H, W), jnp.float32)

    y = group_bottleneck_forward(x, params, groups)
    y = jax.block_until_ready(y)

    y_ref = reference_forward(x, params, groups)
    # Tolerance reflects bf16 MXU inputs (f32 accumulation, f32 residual path).
    np.testing.assert_allclose(np.asarray(y), np.asarray(y_ref),
                               rtol=2e-2, atol=2e-2)

    print("KERNEL_OK")
</pallas_src>

<mosaic_0001>
module attributes {stable_mosaic.version = 11 : i64} {
  func.func @_group_bottleneck_kernel(%arg0: i32, %arg1: memref<2x16x256xf32, #tpu.memory_space<vmem>>, %arg2: memref<9x512xbf16, #tpu.memory_space<vmem>>, %arg3: memref<8x16xbf16, #tpu.memory_space<vmem>>, %arg4: memref<8x1xf32, #tpu.memory_space<vmem>>, %arg5: memref<9x8x8xbf16, #tpu.memory_space<vmem>>, %arg6: memref<8x1xf32, #tpu.memory_space<vmem>>, %arg7: memref<16x8xbf16, #tpu.memory_space<vmem>>, %arg8: memref<16x1xf32, #tpu.memory_space<vmem>>, %arg9: memref<2x16x256xf32, #tpu.memory_space<vmem>>, %arg10: memref<8x657xbf16, #tpu.memory_space<vmem>>) attributes {dimension_semantics = [#tpu.dimension_semantics<parallel>], iteration_bounds = array<i64: 2>, scalar_prefetch = 0 : i64, scratch_operands = 1 : i64, tpu.core_type = #tpu.core_type<tc>, window_params = [{transform_indices = @transform_0, window_bounds = array<i64: 2, 16, 256>}, {pipeline_mode = #tpu.pipeline_mode<synchronous>, transform_indices = @transform_1, window_bounds = array<i64: 9, 512>}, {pipeline_mode = #tpu.pipeline_mode<synchronous>, transform_indices = @transform_2, window_bounds = array<i64: 8, 16>}, {pipeline_mode = #tpu.pipeline_mode<synchronous>, transform_indices = @transform_3, window_bounds = array<i64: 8, 1>}, {pipeline_mode = #tpu.pipeline_mode<synchronous>, transform_indices = @transform_4, window_bounds = array<i64: 9, 8, 8>}, {pipeline_mode = #tpu.pipeline_mode<synchronous>, transform_indices = @transform_5, window_bounds = array<i64: 8, 1>}, {pipeline_mode = #tpu.pipeline_mode<synchronous>, transform_indices = @transform_6, window_bounds = array<i64: 16, 8>}, {pipeline_mode = #tpu.pipeline_mode<synchronous>, transform_indices = @transform_7, window_bounds = array<i64: 16, 1>}, {transform_indices = @transform_8, window_bounds = array<i64: 2, 16, 256>}]} {
    %c0 = arith.constant 0 : index
    %c0_0 = arith.constant 0 : index
    %c0_1 = arith.constant 0 : index
    %0 = vector.load %arg1[%c0, %c0_0, %c0_1] : memref<2x16x256xf32, #tpu.memory_space<vmem>>, vector<1x16x256xf32>
    %1 = vector.shape_cast %0 : vector<1x16x256xf32> to vector<16x256xf32>
    %c1 = arith.constant 1 : index
    %c0_2 = arith.constant 0 : index
    %c0_3 = arith.constant 0 : index
    %2 = vector.load %arg1[%c1, %c0_2, %c0_3] : memref<2x16x256xf32, #tpu.memory_space<vmem>>, vector<1x16x256xf32>
    %3 = vector.shape_cast %2 : vector<1x16x256xf32> to vector<16x256xf32>
    %4 = tpu.concatenate %1, %3 in 1 : vector<16x256xf32>, vector<16x256xf32> -> vector<16x512xf32>
    %c0_4 = arith.constant 0 : index
    %c0_5 = arith.constant 0 : index
    %5 = vector.load %arg3[%c0_4, %c0_5] : memref<8x16xbf16, #tpu.memory_space<vmem>>, vector<8x16xbf16>
    %6 = arith.truncf %4 : vector<16x512xf32> to vector<16x512xbf16>
    %cst = arith.constant dense<0.000000e+00> : vector<8x512xf32>
    %7 = tpu.matmul %5, %6, %cst {dimension_numbers = #tpu.dot_dimension_numbers<[1], [0], [0], [1], [0, 0, 1, 1], [], []>} : vector<8x16xbf16>, vector<16x512xbf16>, vector<8x512xf32> -> vector<8x512xf32>
    %c0_6 = arith.constant 0 : index
    %c0_7 = arith.constant 0 : index
    %8 = vector.load %arg4[%c0_6, %c0_7] : memref<8x1xf32, #tpu.memory_space<vmem>>, vector<8x1xf32>
    %9 = vector.broadcast %8 : vector<8x1xf32> to vector<8x512xf32>
    %10 = arith.addf %7, %9 : vector<8x512xf32>
    %cst_8 = arith.constant 0.000000e+00 : f32
    %11 = vector.broadcast %cst_8 : f32 to vector<8x512xf32>
    %12 = arith.maximumf %10, %11 : vector<8x512xf32>
    %13 = arith.truncf %12 : vector<8x512xf32> to vector<8x512xbf16>
    %cst_9 = arith.constant 0.000000e+00 : bf16
    %14 = vector.broadcast %cst_9 : bf16 to vector<8x17xbf16>
    %c0_10 = arith.constant 0 : index
    %c111 = arith.constant 111 : index
    %15 = vector.load %arg10[%c0_10, %c111] : memref<8x657xbf16, #tpu.memory_space<vmem>>, vector<8x17xbf16>
    tpu.vector_store %arg10[%c0_10, %c111], %14 {strides = array<i32>} : memref<8x657xbf16, #tpu.memory_space<vmem>>, vector<8x17xbf16>,
    %c0_11 = arith.constant 0 : index
    %c640 = arith.constant 640 : index
    %16 = vector.load %arg10[%c0_11, %c640] : memref<8x657xbf16, #tpu.memory_space<vmem>>, vector<8x17xbf16>
    tpu.vector_store %arg10[%c0_11, %c640], %14 {strides = array<i32>} : memref<8x657xbf16, #tpu.memory_space<vmem>>, vector<8x17xbf16>,
    %c0_12 = arith.constant 0 : index
    %c128 = arith.constant 128 : index
    %17 = vector.load %arg10[%c0_12, %c128] : memref<8x657xbf16, #tpu.memory_space<vmem>>, vector<8x512xbf16>
    tpu.vector_store %arg10[%c0_12, %c128], %13 {strides = array<i32>} : memref<8x657xbf16, #tpu.memory_space<vmem>>, vector<8x512xbf16>,
    %c0_13 = arith.constant 0 : index
    %c111_14 = arith.constant 111 : index
    %18 = vector.load %arg10[%c0_13, %c111_14] : memref<8x657xbf16, #tpu.memory_space<vmem>>, vector<8x512xbf16>
    %c0_15 = arith.constant 0 : index
    %c0_16 = arith.constant 0 : index
    %19 = vector.load %arg2[%c0_15, %c0_16] : memref<9x512xbf16, #tpu.memory_space<vmem>>, vector<1x512xbf16>
    %20 = vector.broadcast %19 : vector<1x512xbf16> to vector<8x512xbf16>
    %21 = arith.mulf %18, %20 : vector<8x512xbf16>
    %c0_17 = arith.constant 0 : index
    %c0_18 = arith.constant 0 : index
    %c0_19 = arith.constant 0 : index
    %22 = vector.load %arg5[%c0_17, %c0_18, %c0_19] : memref<9x8x8xbf16, #tpu.memory_space<vmem>>, vector<1x8x8xbf16>
    %23 = vector.shape_cast %22 : vector<1x8x8xbf16> to vector<8x8xbf16>
    %cst_20 = arith.constant dense<0.000000e+00> : vector<8x512xf32>
    %24 = tpu.matmul %23, %21, %cst_20 {dimension_numbers = #tpu.dot_dimension_numbers<[1], [0], [0], [1], [0, 0, 1, 1], [], []>} : vector<8x8xbf16>, vector<8x512xbf16>, vector<8x512xf32> -> vector<8x512xf32>
    %c0_21 = arith.constant 0 : index
    %c112 = arith.constant 112 : index
    %25 = vector.load %arg10[%c0_21, %c112] : memref<8x657xbf16, #tpu.memory_space<vmem>>, vector<8x512xbf16>
    %c1_22 = arith.constant 1 : index
    %c0_23 = arith.constant 0 : index
    %26 = vector.load %arg2[%c1_22, %c0_23] : memref<9x512xbf16, #tpu.memory_space<vmem>>, vector<1x512xbf16>
    %27 = vector.broadcast %26 : vector<1x512xbf16> to vector<8x512xbf16>
    %28 = arith.mulf %25, %27 : vector<8x512xbf16>
    %c1_24 = arith.constant 1 : index
    %c0_25 = arith.constant 0 : index
    %c0_26 = arith.constant 0 : index
    %29 = vector.load %arg5[%c1_24, %c0_25, %c0_26] : memref<9x8x8xbf16, #tpu.memory_space<vmem>>, vector<1x8x8xbf16>
    %30 = vector.shape_cast %29 : vector<1x8x8xbf16> to vector<8x8xbf16>
    %cst_27 = arith.constant dense<0.000000e+00> : vector<8x512xf32>
    %31 = tpu.matmul %30, %28, %cst_27 {dimension_numbers = #tpu.dot_dimension_numbers<[1], [0], [0], [1], [0, 0, 1, 1], [], []>} : vector<8x8xbf16>, vector<8x512xbf16>, vector<8x512xf32> -> vector<8x512xf32>
    %32 = arith.addf %24, %31 : vector<8x512xf32>
    %c0_28 = arith.constant 0 : index
    %c113 = arith.constant 113 : index
    %33 = vector.load %arg10[%c0_28, %c113] : memref<8x657xbf16, #tpu.memory_space<vmem>>, vector<8x512xbf16>
    %c2 = arith.constant 2 : index
    %c0_29 = arith.constant 0 : index
    %34 = vector.load %arg2[%c2, %c0_29] : memref<9x512xbf16, #tpu.memory_space<vmem>>, vector<1x512xbf16>
    %35 = vector.broadcast %34 : vector<1x512xbf16> to vector<8x512xbf16>
    %36 = arith.mulf %33, %35 : vector<8x512xbf16>
    %c2_30 = arith.constant 2 : index
    %c0_31 = arith.constant 0 : index
    %c0_32 = arith.constant 0 : index
    %37 = vector.load %arg5[%c2_30, %c0_31, %c0_32] : memref<9x8x8xbf16, #tpu.memory_space<vmem>>, vector<1x8x8xbf16>
    %38 = vector.shape_cast %37 : vector<1x8x8xbf16> to vector<8x8xbf16>
    %cst_33 = arith.constant dense<0.000000e+00> : vector<8x512xf32>
    %39 = tpu.matmul %38, %36, %cst_33 {dimension_numbers = #tpu.dot_dimension_numbers<[1], [0], [0], [1], [0, 0, 1, 1], [], []>} : vector<8x8xbf16>, vector<8x512xbf16>, vector<8x512xf32> -> vector<8x512xf32>
    %40 = arith.addf %32, %39 : vector<8x512xf32>
    %c0_34 = arith.constant 0 : index
    %c127 = arith.constant 127 : index
    %41 = vector.load %arg10[%c0_34, %c127] : memref<8x657xbf16, #tpu.memory_space<vmem>>, vector<8x512xbf16>
    %c3 = arith.constant 3 : index
    %c0_35 = arith.constant 0 : index
    %42 = vector.load %arg2[%c3, %c0_35] : memref<9x512xbf16, #tpu.memory_space<vmem>>, vector<1x512xbf16>
    %43 = vector.broadcast %42 : vector<1x512xbf16> to vector<8x512xbf16>
    %44 = arith.mulf %41, %43 : vector<8x512xbf16>
    %c3_36 = arith.constant 3 : index
    %c0_37 = arith.constant 0 : index
    %c0_38 = arith.constant 0 : index
    %45 = vector.load %arg5[%c3_36, %c0_37, %c0_38] : memref<9x8x8xbf16, #tpu.memory_space<vmem>>, vector<1x8x8xbf16>
    %46 = vector.shape_cast %45 : vector<1x8x8xbf16> to vector<8x8xbf16>
    %cst_39 = arith.constant dense<0.000000e+00> : vector<8x512xf32>
    %47 = tpu.matmul %46, %44, %cst_39 {dimension_numbers = #tpu.dot_dimension_numbers<[1], [0], [0], [1], [0, 0, 1, 1], [], []>} : vector<8x8xbf16>, vector<8x512xbf16>, vector<8x512xf32> -> vector<8x512xf32>
    %48 = arith.addf %40, %47 : vector<8x512xf32>
    %c4 = arith.constant 4 : index
    %c0_40 = arith.constant 0 : index
    %c0_41 = arith.constant 0 : index
    %49 = vector.load %arg5[%c4, %c0_40, %c0_41] : memref<9x8x8xbf16, #tpu.memory_space<vmem>>, vector<1x8x8xbf16>
    %50 = vector.shape_cast %49 : vector<1x8x8xbf16> to vector<8x8xbf16>
    %cst_42 = arith.constant dense<0.000000e+00> : vector<8x512xf32>
    %51 = tpu.matmul %50, %13, %cst_42 {dimension_numbers = #tpu.dot_dimension_numbers<[1], [0], [0], [1], [0, 0, 1, 1], [], []>} : vector<8x8xbf16>, vector<8x512xbf16>, vector<8x512xf32> -> vector<8x512xf32>
    %52 = arith.addf %48, %51 : vector<8x512xf32>
    %c0_43 = arith.constant 0 : index
    %c129 = arith.constant 129 : index
    %53 = vector.load %arg10[%c0_43, %c129] : memref<8x657xbf16, #tpu.memory_space<vmem>>, vector<8x512xbf16>
    %c5 = arith.constant 5 : index
    %c0_44 = arith.constant 0 : index
    %54 = vector.load %arg2[%c5, %c0_44] : memref<9x512xbf16, #tpu.memory_space<vmem>>, vector<1x512xbf16>
    %55 = vector.broadcast %54 : vector<1x512xbf16> to vector<8x512xbf16>
    %56 = arith.mulf %53, %55 : vector<8x512xbf16>
    %c5_45 = arith.constant 5 : index
    %c0_46 = arith.constant 0 : index
    %c0_47 = arith.constant 0 : index
    %57 = vector.load %arg5[%c5_45, %c0_46, %c0_47] : memref<9x8x8xbf16, #tpu.memory_space<vmem>>, vector<1x8x8xbf16>
    %58 = vector.shape_cast %57 : vector<1x8x8xbf16> to vector<8x8xbf16>
    %cst_48 = arith.constant dense<0.000000e+00> : vector<8x512xf32>
    %59 = tpu.matmul %58, %56, %cst_48 {dimension_numbers = #tpu.dot_dimension_numbers<[1], [0], [0], [1], [0, 0, 1, 1], [], []>} : vector<8x8xbf16>, vector<8x512xbf16>, vector<8x512xf32> -> vector<8x512xf32>
    %60 = arith.addf %52, %59 : vector<8x512xf32>
    %c0_49 = arith.constant 0 : index
    %c143 = arith.constant 143 : index
    %61 = vector.load %arg10[%c0_49, %c143] : memref<8x657xbf16, #tpu.memory_space<vmem>>, vector<8x512xbf16>
    %c6 = arith.constant 6 : index
    %c0_50 = arith.constant 0 : index
    %62 = vector.load %arg2[%c6, %c0_50] : memref<9x512xbf16, #tpu.memory_space<vmem>>, vector<1x512xbf16>
    %63 = vector.broadcast %62 : vector<1x512xbf16> to vector<8x512xbf16>
    %64 = arith.mulf %61, %63 : vector<8x512xbf16>
    %c6_51 = arith.constant 6 : index
    %c0_52 = arith.constant 0 : index
    %c0_53 = arith.constant 0 : index
    %65 = vector.load %arg5[%c6_51, %c0_52, %c0_53] : memref<9x8x8xbf16, #tpu.memory_space<vmem>>, vector<1x8x8xbf16>
    %66 = vector.shape_cast %65 : vector<1x8x8xbf16> to vector<8x8xbf16>
    %cst_54 = arith.constant dense<0.000000e+00> : vector<8x512xf32>
    %67 = tpu.matmul %66, %64, %cst_54 {dimension_numbers = #tpu.dot_dimension_numbers<[1], [0], [0], [1], [0, 0, 1, 1], [], []>} : vector<8x8xbf16>, vector<8x512xbf16>, vector<8x512xf32> -> vector<8x512xf32>
    %68 = arith.addf %60, %67 : vector<8x512xf32>
    %c0_55 = arith.constant 0 : index
    %c144 = arith.constant 144 : index
    %69 = vector.load %arg10[%c0_55, %c144] : memref<8x657xbf16, #tpu.memory_space<vmem>>, vector<8x512xbf16>
    %c7 = arith.constant 7 : index
    %c0_56 = arith.constant 0 : index
    %70 = vector.load %arg2[%c7, %c0_56] : memref<9x512xbf16, #tpu.memory_space<vmem>>, vector<1x512xbf16>
    %71 = vector.broadcast %70 : vector<1x512xbf16> to vector<8x512xbf16>
    %72 = arith.mulf %69, %71 : vector<8x512xbf16>
    %c7_57 = arith.constant 7 : index
    %c0_58 = arith.constant 0 : index
    %c0_59 = arith.constant 0 : index
    %73 = vector.load %arg5[%c7_57, %c0_58, %c0_59] : memref<9x8x8xbf16, #tpu.memory_space<vmem>>, vector<1x8x8xbf16>
    %74 = vector.shape_cast %73 : vector<1x8x8xbf16> to vector<8x8xbf16>
    %cst_60 = arith.constant dense<0.000000e+00> : vector<8x512xf32>
    %75 = tpu.matmul %74, %72, %cst_60 {dimension_numbers = #tpu.dot_dimension_numbers<[1], [0], [0], [1], [0, 0, 1, 1], [], []>} : vector<8x8xbf16>, vector<8x512xbf16>, vector<8x512xf32> -> vector<8x512xf32>
    %76 = arith.addf %68, %75 : vector<8x512xf32>
    %c0_61 = arith.constant 0 : index
    %c145 = arith.constant 145 : index
    %77 = vector.load %arg10[%c0_61, %c145] : memref<8x657xbf16, #tpu.memory_space<vmem>>, vector<8x512xbf16>
    %c8 = arith.constant 8 : index
    %c0_62 = arith.constant 0 : index
    %78 = vector.load %arg2[%c8, %c0_62] : memref<9x512xbf16, #tpu.memory_space<vmem>>, vector<1x512xbf16>
    %79 = vector.broadcast %78 : vector<1x512xbf16> to vector<8x512xbf16>
    %80 = arith.mulf %77, %79 : vector<8x512xbf16>
    %c8_63 = arith.constant 8 : index
    %c0_64 = arith.constant 0 : index
    %c0_65 = arith.constant 0 : index
    %81 = vector.load %arg5[%c8_63, %c0_64, %c0_65] : memref<9x8x8xbf16, #tpu.memory_space<vmem>>, vector<1x8x8xbf16>
    %82 = vector.shape_cast %81 : vector<1x8x8xbf16> to vector<8x8xbf16>
    %cst_66 = arith.constant dense<0.000000e+00> : vector<8x512xf32>
    %83 = tpu.matmul %82, %80, %cst_66 {dimension_numbers = #tpu.dot_dimension_numbers<[1], [0], [0], [1], [0, 0, 1, 1], [], []>} : vector<8x8xbf16>, vector<8x512xbf16>, vector<8x512xf32> -> vector<8x512xf32>
    %84 = arith.addf %76, %83 : vector<8x512xf32>
    %c0_67 = arith.constant 0 : index
    %c0_68 = arith.constant 0 : index
    %85 = vector.load %arg6[%c0_67, %c0_68] : memref<8x1xf32, #tpu.memory_space<vmem>>, vector<8x1xf32>
    %86 = vector.broadcast %85 : vector<8x1xf32> to vector<8x512xf32>
    %87 = arith.addf %84, %86 : vector<8x512xf32>
    %cst_69 = arith.constant 0.000000e+00 : f32
    %88 = vector.broadcast %cst_69 : f32 to vector<8x512xf32>
    %89 = arith.maximumf %87, %88 : vector<8x512xf32>
    %c0_70 = arith.constant 0 : index
    %c0_71 = arith.constant 0 : index
    %90 = vector.load %arg7[%c0_70, %c0_71] : memref<16x8xbf16, #tpu.memory_space<vmem>>, vector<16x8xbf16>
    %91 = arith.truncf %89 : vector<8x512xf32> to vector<8x512xbf16>
    %cst_72 = arith.constant dense<0.000000e+00> : vector<16x512xf32>
    %92 = tpu.matmul %90, %91, %cst_72 {dimension_numbers = #tpu.dot_dimension_numbers<[1], [0], [0], [1], [0, 0, 1, 1], [], []>} : vector<16x8xbf16>, vector<8x512xbf16>, vector<16x512xf32> -> vector<16x512xf32>
    %c0_73 = arith.constant 0 : index
    %c0_74 = arith.constant 0 : index
    %93 = vector.load %arg8[%c0_73, %c0_74] : memref<16x1xf32, #tpu.memory_space<vmem>>, vector<16x1xf32>
    %94 = vector.broadcast %93 : vector<16x1xf32> to vector<16x512xf32>
    %95 = arith.addf %92, %94 : vector<16x512xf32>
    %96 = arith.addf %95, %4 : vector<16x512xf32>
    %cst_75 = arith.constant 0.000000e+00 : f32
    %97 = vector.broadcast %cst_75 : f32 to vector<16x512xf32>
    %98 = arith.maximumf %96, %97 : vector<16x512xf32>
    %99 = vector.extract_strided_slice %98 {offsets = [0, 0], sizes = [16, 256], strides = [1, 1]} : vector<16x512xf32> to vector<16x256xf32>
    %c0_76 = arith.constant 0 : index
    %c0_77 = arith.constant 0 : index
    %c0_78 = arith.constant 0 : index
    %100 = vector.load %arg9[%c0_76, %c0_77, %c0_78] : memref<2x16x256xf32, #tpu.memory_space<vmem>>, vector<1x16x256xf32>
    %101 = vector.shape_cast %100 : vector<1x16x256xf32> to vector<16x256xf32>
    %102 = vector.shape_cast %99 : vector<16x256xf32> to vector<1x16x256xf32>
    tpu.vector_store %arg9[%c0_76, %c0_77, %c0_78], %102 {strides = array<i32>} : memref<2x16x256xf32, #tpu.memory_space<vmem>>, vector<1x16x256xf32>,
    %103 = vector.extract_strided_slice %98 {offsets = [0, 256], sizes = [16, 256], strides = [1, 1]} : vector<16x512xf32> to vector<16x256xf32>
    %c1_79 = arith.constant 1 : index
    %c0_80 = arith.constant 0 : index
    %c0_81 = arith.constant 0 : index
    %104 = vector.load %arg9[%c1_79, %c0_80, %c0_81] : memref<2x16x256xf32, #tpu.memory_space<vmem>>, vector<1x16x256xf32>
    %105 = vector.shape_cast %104 : vector<1x16x256xf32> to vector<16x256xf32>
    %106 = vector.shape_cast %103 : vector<16x256xf32> to vector<1x16x256xf32>
    tpu.vector_store %arg9[%c1_79, %c0_80, %c0_81], %106 {strides = array<i32>} : memref<2x16x256xf32, #tpu.memory_space<vmem>>, vector<1x16x256xf32>,
    return
  }
  func.func @transform_0(%arg0: i32) -> (i32, i32, i32) {
    %c0_i32 = arith.constant 0 : i32
    %c0_i32_0 = arith.constant 0 : i32
    %c0_i32_1 = arith.constant 0 : i32
    return %arg0, %c0_i32, %c0_i32_0 : i32, i32, i32
  }
  func.func @transform_1(%arg0: i32) -> (i32, i32) {
    %c0_i32 = arith.constant 0 : i32
    %c0_i32_0 = arith.constant 0 : i32
    %c0_i32_1 = arith.constant 0 : i32
    return %c0_i32, %c0_i32_0 : i32, i32
  }
  func.func @transform_2(%arg0: i32) -> (i32, i32) {
    %c0_i32 = arith.constant 0 : i32
    %c0_i32_0 = arith.constant 0 : i32
    %c0_i32_1 = arith.constant 0 : i32
    return %c0_i32, %c0_i32_0 : i32, i32
  }
  func.func @transform_3(%arg0: i32) -> (i32, i32) {
    %c0_i32 = arith.constant 0 : i32
    %c0_i32_0 = arith.constant 0 : i32
    %c0_i32_1 = arith.constant 0 : i32
    return %c0_i32, %c0_i32_0 : i32, i32
  }
  func.func @transform_4(%arg0: i32) -> (i32, i32, i32) {
    %c0_i32 = arith.constant 0 : i32
    %c0_i32_0 = arith.constant 0 : i32
    %c0_i32_1 = arith.constant 0 : i32
    %c0_i32_2 = arith.constant 0 : i32
    return %c0_i32, %c0_i32_0, %c0_i32_1 : i32, i32, i32
  }
  func.func @transform_5(%arg0: i32) -> (i32, i32) {
    %c0_i32 = arith.constant 0 : i32
    %c0_i32_0 = arith.constant 0 : i32
    %c0_i32_1 = arith.constant 0 : i32
    return %c0_i32, %c0_i32_0 : i32, i32
  }
  func.func @transform_6(%arg0: i32) -> (i32, i32) {
    %c0_i32 = arith.constant 0 : i32
    %c0_i32_0 = arith.constant 0 : i32
    %c0_i32_1 = arith.constant 0 : i32
    return %c0_i32, %c0_i32_0 : i32, i32
  }
  func.func @transform_7(%arg0: i32) -> (i32, i32) {
    %c0_i32 = arith.constant 0 : i32
    %c0_i32_0 = arith.constant 0 : i32
    %c0_i32_1 = arith.constant 0 : i32
    return %c0_i32, %c0_i32_0 : i32, i32
  }
  func.func @transform_8(%arg0: i32) -> (i32, i32, i32) {
    %c0_i32 = arith.constant 0 : i32
    %c0_i32_0 = arith.constant 0 : i32
    %c0_i32_1 = arith.constant 0 : i32
    return %arg0, %c0_i32, %c0_i32_0 : i32, i32, i32
  }
}

</mosaic_0001>

<llo_original>
// kernel: group_bottleneck_forward.1
$region0: #{group_bottleneck_forward.1}
  #allocation0 [shape = 'u32[]', space=smem, size = 0x4, offset = 0x4, fixed_abs, tag = 'smem constant byte address 0x4 - core index']
  #allocation1 [shape = 'u32[144,128]{1,0:T(1,128)}', space=vmem, size = 0x12000, scoped, tag = 'internal scratch']
  #allocation2 [shape = 'bf16[8,657]{1,0:T(8,128)(2,1)}', space=vmem, size = 0x3000, scoped, tag = 'scratch operand']
  %s0 = inlined_call_operand.vmem [shape: f32[4,16,256], index: 0, kind: input, shape index: {}]
  %s1 = inlined_call_operand.vmem [shape: bf16[9,512], index: 1, kind: input, shape index: {}]
  %s2 = inlined_call_operand.vmem [shape: bf16[8,16], index: 2, kind: input, shape index: {}]
  %s3 = inlined_call_operand.vmem [shape: f32[8,1], index: 3, kind: input, shape index: {}]
  %s4 = inlined_call_operand.vmem [shape: bf16[9,8,8], index: 4, kind: input, shape index: {}]
  %s5 = inlined_call_operand.vmem [shape: f32[8,1], index: 5, kind: input, shape index: {}]
  %s6 = inlined_call_operand.vmem [shape: bf16[16,8], index: 6, kind: input, shape index: {}]
  %s7 = inlined_call_operand.vmem [shape: f32[16,1], index: 7, kind: input, shape index: {}]
  %s8 = inlined_call_operand.vmem [shape: f32[4,16,256], index: 8, kind: output, shape index: {}]
  %s9 = sld [smem:[#allocation0]]
  $region65: #{group_bottleneck_forward.1} parent=0
    _
  %s11 = ssub.s32 1, %s9
  %s12 = scalar_select 0, %s11, %s9
  loop: start=0, step=1, limit=4
  $region2: #{group_bottleneck_forward.1} parent=0 // loop_pre_header
    _
  $region3: #{group_bottleneck_forward.1} parent=0 // loop_header
    %s14 = sphi 0, %s18
    %p15 = scmp.ge.s32.totalorder %s14, 4
    %s24 = sphi 0, %s26
    %s27 = sphi 0, %s24
    %s28 = sphi 0, %s27
    %s44 = sphi 0, %s28
    %s48 = sphi 0, %s48
    %s50 = sphi 0, %s48
    %s51 = sphi 0, %s50
    %s65 = sphi 0, %s51
    %s69 = sphi 0, %s69
    %s71 = sphi 0, %s69
    %s72 = sphi 0, %s71
    %s86 = sphi 0, %s72
    %s90 = sphi 0, %s90
    %s92 = sphi 0, %s90
    %s93 = sphi 0, %s92
    %s107 = sphi 0, %s93
    %s111 = sphi 0, %s111
    %s113 = sphi 0, %s111
    %s114 = sphi 0, %s113
    %s128 = sphi 0, %s114
    %s132 = sphi 0, %s132
    %s134 = sphi 0, %s132
    %s135 = sphi 0, %s134
    %s149 = sphi 0, %s135
    %s153 = sphi 0, %s153
    %s155 = sphi 0, %s153
    %s156 = sphi 0, %s155
    %s170 = sphi 0, %s156
    %s174 = sphi 0, %s174
    %s176 = sphi 0, %s174
    %s177 = sphi 0, %s176
    %s191 = sphi 0, %s177
    %s197 = sphi 0, %s199
    %s200 = sphi 0, %s197
    %s201 = sphi 0, %s200
    %s217 = sphi 0, %s201
  $region4: #{group_bottleneck_forward.1} parent=0 // loop_header_branch
    %17 = sbr.rel (%p15) target = $region8
  $region5: #{group_bottleneck_forward.1} parent=0 // loop_body
    %s19 = ssub.s32 %s14, 1
    %s20 = ssub.s32 %s14, 2
    %s21 = sadd.s32 %s14, 1
    %s22 = ssub.s32 %s14, %s21
    %p23 = scmp.eq.s32.totalorder %s22, 0
    %s25 = sadd.s32 %s24, 1
    %s26 = scalar_select %p23, %s24, %s25
    %p29 = pneg %p23
    %p30 = scmp.eq.s32.totalorder %s14, 1
    %p31 = por %p29, %p30
    %p32 = scmp.ne.s32.totalorder %s24, %s27
    %p33 = scmp.eq.s32.totalorder %s14, 0
    %p34 = por %p32, %p33
    %p35 = scmp.ne.s32.totalorder %s24, %s27
    %p36 = scmp.eq.s32.totalorder %s19, 1
    %p37 = por %p35, %p36
    %p38 = scmp.ne.s32.totalorder %s27, %s28
    %p39 = scmp.eq.s32.totalorder %s19, 0
    %p40 = por %p38, %p39
    %p41 = scmp.ne.s32.totalorder %s27, %s28
    %p42 = scmp.eq.s32.totalorder %s20, 1
    %p43 = por %p41, %p42
    %p45 = scmp.ne.s32.totalorder %s28, %s44
    %p46 = scmp.eq.s32.totalorder %s20, 0
    %p47 = por %p45, %p46
    %s49 = sadd.s32 %s48, 1
    %p52 = scmp.eq.s32.totalorder %s14, 1
    %p53 = scmp.ne.s32.totalorder %s48, %s50
    %p54 = scmp.eq.s32.totalorder %s14, 0
    %p55 = por %p53, %p54
    %p56 = scmp.ne.s32.totalorder %s48, %s50
    %p57 = scmp.eq.s32.totalorder %s19, 1
    %p58 = por %p56, %p57
    %p59 = scmp.ne.s32.totalorder %s50, %s51
    %p60 = scmp.eq.s32.totalorder %s19, 0
    %p61 = por %p59, %p60
    %p62 = scmp.ne.s32.totalorder %s50, %s51
    %p63 = scmp.eq.s32.totalorder %s20, 1
    %p64 = por %p62, %p63
    %p66 = scmp.ne.s32.totalorder %s51, %s65
    %p67 = scmp.eq.s32.totalorder %s20, 0
    %p68 = por %p66, %p67
    %s70 = sadd.s32 %s69, 1
    %p73 = scmp.eq.s32.totalorder %s14, 1
    %p74 = scmp.ne.s32.totalorder %s69, %s71
    %p75 = scmp.eq.s32.totalorder %s14, 0
    %p76 = por %p74, %p75
    %p77 = scmp.ne.s32.totalorder %s69, %s71
    %p78 = scmp.eq.s32.totalorder %s19, 1
    %p79 = por %p77, %p78
    %p80 = scmp.ne.s32.totalorder %s71, %s72
    %p81 = scmp.eq.s32.totalorder %s19, 0
    %p82 = por %p80, %p81
    %p83 = scmp.ne.s32.totalorder %s71, %s72
    %p84 = scmp.eq.s32.totalorder %s20, 1
    %p85 = por %p83, %p84
    %p87 = scmp.ne.s32.totalorder %s72, %s86
    %p88 = scmp.eq.s32.totalorder %s20, 0
    %p89 = por %p87, %p88
    %s91 = sadd.s32 %s90, 1
    %p94 = scmp.eq.s32.totalorder %s14, 1
    %p95 = scmp.ne.s32.totalorder %s90, %s92
    %p96 = scmp.eq.s32.totalorder %s14, 0
    %p97 = por %p95, %p96
    %p98 = scmp.ne.s32.totalorder %s90, %s92
    %p99 = scmp.eq.s32.totalorder %s19, 1
    %p100 = por %p98, %p99
    %p101 = scmp.ne.s32.totalorder %s92, %s93
    %p102 = scmp.eq.s32.totalorder %s19, 0
    %p103 = por %p101, %p102
    %p104 = scmp.ne.s32.totalorder %s92, %s93
    %p105 = scmp.eq.s32.totalorder %s20, 1
    %p106 = por %p104, %p105
    %p108 = scmp.ne.s32.totalorder %s93, %s107
    %p109 = scmp.eq.s32.totalorder %s20, 0
    %p110 = por %p108, %p109
    %s112 = sadd.s32 %s111, 1
    %p115 = scmp.eq.s32.totalorder %s14, 1
    %p116 = scmp.ne.s32.totalorder %s111, %s113
    %p117 = scmp.eq.s32.totalorder %s14, 0
    %p118 = por %p116, %p117
    %p119 = scmp.ne.s32.totalorder %s111, %s113
    %p120 = scmp.eq.s32.totalorder %s19, 1
    %p121 = por %p119, %p120
    %p122 = scmp.ne.s32.totalorder %s113, %s114
    %p123 = scmp.eq.s32.totalorder %s19, 0
    %p124 = por %p122, %p123
    %p125 = scmp.ne.s32.totalorder %s113, %s114
    %p126 = scmp.eq.s32.totalorder %s20, 1
    %p127 = por %p125, %p126
    %p129 = scmp.ne.s32.totalorder %s114, %s128
    %p130 = scmp.eq.s32.totalorder %s20, 0
    %p131 = por %p129, %p130
    %s133 = sadd.s32 %s132, 1
    %p136 = scmp.eq.s32.totalorder %s14, 1
    %p137 = scmp.ne.s32.totalorder %s132, %s134
    %p138 = scmp.eq.s32.totalorder %s14, 0
    %p139 = por %p137, %p138
    %p140 = scmp.ne.s32.totalorder %s132, %s134
    %p141 = scmp.eq.s32.totalorder %s19, 1
    %p142 = por %p140, %p141
    %p143 = scmp.ne.s32.totalorder %s134, %s135
    %p144 = scmp.eq.s32.totalorder %s19, 0
    %p145 = por %p143, %p144
    %p146 = scmp.ne.s32.totalorder %s134, %s135
    %p147 = scmp.eq.s32.totalorder %s20, 1
    %p148 = por %p146, %p147
    %p150 = scmp.ne.s32.totalorder %s135, %s149
    %p151 = scmp.eq.s32.totalorder %s20, 0
    %p152 = por %p150, %p151
    %s154 = sadd.s32 %s153, 1
    %p157 = scmp.eq.s32.totalorder %s14, 1
    %p158 = scmp.ne.s32.totalorder %s153, %s155
    %p159 = scmp.eq.s32.totalorder %s14, 0
    %p160 = por %p158, %p159
    %p161 = scmp.ne.s32.totalorder %s153, %s155
    %p162 = scmp.eq.s32.totalorder %s19, 1
    %p163 = por %p161, %p162
    %p164 = scmp.ne.s32.totalorder %s155, %s156
    %p165 = scmp.eq.s32.totalorder %s19, 0
    %p166 = por %p164, %p165
    %p167 = scmp.ne.s32.totalorder %s155, %s156
    %p168 = scmp.eq.s32.totalorder %s20, 1
    %p169 = por %p167, %p168
    %p171 = scmp.ne.s32.totalorder %s156, %s170
    %p172 = scmp.eq.s32.totalorder %s20, 0
    %p173 = por %p171, %p172
    %s175 = sadd.s32 %s174, 1
    %p178 = scmp.eq.s32.totalorder %s14, 1
    %p179 = scmp.ne.s32.totalorder %s174, %s176
    %p180 = scmp.eq.s32.totalorder %s14, 0
    %p181 = por %p179, %p180
    %p182 = scmp.ne.s32.totalorder %s174, %s176
    %p183 = scmp.eq.s32.totalorder %s19, 1
    %p184 = por %p182, %p183
    %p185 = scmp.ne.s32.totalorder %s176, %s177
    %p186 = scmp.eq.s32.totalorder %s19, 0
    %p187 = por %p185, %p186
    %p188 = scmp.ne.s32.totalorder %s176, %s177
    %p189 = scmp.eq.s32.totalorder %s20, 1
    %p190 = por %p188, %p189
    %p192 = scmp.ne.s32.totalorder %s177, %s191
    %p193 = scmp.eq.s32.totalorder %s20, 0
    %p194 = por %p192, %p193
    %s195 = ssub.s32 %s14, %s21
    %p196 = scmp.eq.s32.totalorder %s195, 0
    %s198 = sadd.s32 %s197, 1
    %s199 = scalar_select %p196, %s197, %s198
    %p202 = pneg %p196
    %p203 = scmp.eq.s32.totalorder %s14, 1
    %p204 = por %p202, %p203
    %p205 = scmp.ne.s32.totalorder %s197, %s200
    %p206 = scmp.eq.s32.totalorder %s14, 0
    %p207 = por %p205, %p206
    %p208 = scmp.ne.s32.totalorder %s197, %s200
    %p209 = scmp.eq.s32.totalorder %s19, 1
    %p210 = por %p208, %p209
    %p211 = scmp.ne.s32.totalorder %s200, %s201
    %p212 = scmp.eq.s32.totalorder %s19, 0
    %p213 = por %p211, %p212
    %p214 = scmp.ne.s32.totalorder %s200, %s201
    %p215 = scmp.eq.s32.totalorder %s20, 1
    %p216 = por %p214, %p215
    %p218 = scmp.ne.s32.totalorder %s201, %s217
    %p219 = scmp.eq.s32.totalorder %s20, 0
    %p220 = por %p218, %p219
    %p221 = scmp.le.s32.totalorder 1, %s14
    %p222 = scmp.lt.s32.totalorder %s14, 3
    %p223 = pnand %p221, %p222
    %p224 = pneg %p223
    // Predicated region
    $region9: #{group_bottleneck_forward.1} parent=5 // pred_check
      _
    $region10: #{group_bottleneck_forward.1} parent=5 // pred_check_branch
      %226 = sbr.rel (%p223) target = $region12
    $region11: #{group_bottleneck_forward.1} parent=5 // pred_region
      %s227 = ssub.s32 %s14, 1
      // Predicated region
      $region13: #{group_bottleneck_forward.1} parent=11 // pred_check
        %p228 = pneg %p61
      $region14: #{group_bottleneck_forward.1} parent=11 // pred_check_branch
        %230 = sbr.rel (%p228) target = $region16
      $region15: #{group_bottleneck_forward.1} parent=11 // pred_region
        _
      $region16: #{group_bottleneck_forward.1} parent=11 // pred_fallthru
        _
      // Predicated region
      $region17: #{group_bottleneck_forward.1} parent=11 // pred_check
        %p231 = pneg %p82
      $region18: #{group_bottleneck_forward.1} parent=11 // pred_check_branch
        %233 = sbr.rel (%p231) target = $region20
      $region19: #{group_bottleneck_forward.1} parent=11 // pred_region
        _
      $region20: #{group_bottleneck_forward.1} parent=11 // pred_fallthru
        _
      // Predicated region
      $region21: #{group_bottleneck_forward.1} parent=11 // pred_check
        %p234 = pneg %p103
      $region22: #{group_bottleneck_forward.1} parent=11 // pred_check_branch
        %236 = sbr.rel (%p234) target = $region24
      $region23: #{group_bottleneck_forward.1} parent=11 // pred_region
        _
      $region24: #{group_bottleneck_forward.1} parent=11 // pred_fallthru
        _
      // Predicated region
      $region25: #{group_bottleneck_forward.1} parent=11 // pred_check
        %p237 = pneg %p124
      $region26: #{group_bottleneck_forward.1} parent=11 // pred_check_branch
        %239 = sbr.rel (%p237) target = $region28
      $region27: #{group_bottleneck_forward.1} parent=11 // pred_region
        _
      $region28: #{group_bottleneck_forward.1} parent=11 // pred_fallthru
        _
      // Predicated region
      $region29: #{group_bottleneck_forward.1} parent=11 // pred_check
        %p240 = pneg %p145
      $region30: #{group_bottleneck_forward.1} parent=11 // pred_check_branch
        %242 = sbr.rel (%p240) target = $region32
      $region31: #{group_bottleneck_forward.1} parent=11 // pred_region
        _
      $region32: #{group_bottleneck_forward.1} parent=11 // pred_fallthru
        _
      // Predicated region
      $region33: #{group_bottleneck_forward.1} parent=11 // pred_check
        %p243 = pneg %p166
      $region34: #{group_bottleneck_forward.1} parent=11 // pred_check_branch
        %245 = sbr.rel (%p243) target = $region36
      $region35: #{group_bottleneck_forward.1} parent=11 // pred_region
        _
      $region36: #{group_bottleneck_forward.1} parent=11 // pred_fallthru
        _
      // Predicated region
      $region37: #{group_bottleneck_forward.1} parent=11 // pred_check
        %p246 = pneg %p187
      $region38: #{group_bottleneck_forward.1} parent=11 // pred_check_branch
        %248 = sbr.rel (%p246) target = $region40
      $region39: #{group_bottleneck_forward.1} parent=11 // pred_region
        _
      $region40: #{group_bottleneck_forward.1} parent=11 // pred_fallthru
        _
    $region12: #{group_bottleneck_forward.1} parent=5 // pred_fallthru
      _
    %p249 = scmp.lt.s32.totalorder %s14, 2
    // Predicated region
    $region41: #{group_bottleneck_forward.1} parent=5 // pred_check
      %p250 = pneg %p249
    $region42: #{group_bottleneck_forward.1} parent=5 // pred_check_branch
      %252 = sbr.rel (%p250) target = $region44
    $region43: #{group_bottleneck_forward.1} parent=5 // pred_region
      // Predicated region
      $region45: #{group_bottleneck_forward.1} parent=43 // pred_check
        %p253 = pneg %p34
      $region46: #{group_bottleneck_forward.1} parent=43 // pred_check_branch
        %255 = sbr.rel (%p253) target = $region48
      $region47: #{group_bottleneck_forward.1} parent=43 // pred_region
        %s256 = smul.u32 2, %s14
        %p257 = scmp.lt.s32.totalorder %s256, 3
        %s258 = scalar_select %p257, %s256, 3
        %s259 = smul.addr %s258, 4
        %s260 = smul.addr %s259, 8
        %s261 = scalar_lea.vmem %s0, %s260
        %s262 = smul.u32 2, %s14
      $region48: #{group_bottleneck_forward.1} parent=43 // pred_fallthru
        _
    $region44: #{group_bottleneck_forward.1} parent=5 // pred_fallthru
      _
    %p263 = scmp.le.s32.totalorder 1, %s14
    %p264 = scmp.lt.s32.totalorder %s14, 3
    %p265 = pnand %p263, %p264
    %p266 = pneg %p265
    // Predicated region
    $region49: #{group_bottleneck_forward.1} parent=5 // pred_check
      _
    $region50: #{group_bottleneck_forward.1} parent=5 // pred_check_branch
      %268 = sbr.rel (%p265) target = $region52
    $region51: #{group_bottleneck_forward.1} parent=5 // pred_region
      %s269 = ssub.s32 %s14, 1
      %s270 = smul.u32 2, %s19
      %p271 = scmp.lt.s32.totalorder %s270, 3
      %s272 = scalar_select %p271, %s270, 3
      %s273 = smul.addr %s272, 4
      %s274 = smul.addr %s273, 8
      %s275 = scalar_lea.vmem %s0, %s274
      %p276 = pneg %p40
      %p277 = pneg %p37
      %p278 = pneg %p61
      %p279 = pneg %p58
      %p280 = pneg %p82
      %p281 = pneg %p79
      %p282 = pneg %p103
      %p283 = pneg %p100
      %p284 = pneg %p124
      %p285 = pneg %p121
      %p286 = pneg %p145
      %p287 = pneg %p142
      %p288 = pneg %p166
      %p289 = pneg %p163
      %p290 = pneg %p187
      %p291 = pneg %p184
      %p292 = pneg %p213
      %p293 = pneg %p210
      %s294 = smul.u32 2, %s19
      %p295 = scmp.lt.s32.totalorder %s294, 3
      %s296 = scalar_select %p295, %s294, 3
      %s297 = smul.addr %s296, 4
      %s298 = smul.addr %s297, 8
      %s299 = scalar_lea.vmem %s8, %s298
      %s300 = smul.u32 2, %s19
      %p301 = scmp.lt.s32.totalorder %s300, 3
      %s302 = scalar_select %p301, %s300, 3
      %s303 = smul.addr %s302, 4
      %s304 = smul.addr %s303, 8
      %s305 = scalar_lea.vmem %s0, %s304
      %s306 = smul.u32 2, %s19
      %s307 = smul.u32 2, %s19
      %p308 = scmp.lt.s32.totalorder %s307, 3
      %s309 = scalar_select %p308, %s307, 3
      %s310 = smul.addr %s309, 4
      %s311 = smul.addr %s310, 8
      %s312 = scalar_lea.vmem %s8, %s311
      %s313 = smul.u32 2, %s19
      %v315 = vld [vmem:[%s305] sm:$0xff]
      %v316 = vld [vmem:[%s305 + $0x8] sm:$0xff]
      %v317 = vld [vmem:[%s305 + $0x10] sm:$0xff]
      %v318 = vld [vmem:[%s305 + $0x18] sm:$0xff]
      %s319 = scalar_lea.vmem %s305, 32
      %v320 = vld [vmem:[%s319] sm:$0xff]
      %v321 = vld [vmem:[%s319 + $0x8] sm:$0xff]
      %v322 = vld [vmem:[%s319 + $0x10] sm:$0xff]
      %v323 = vld [vmem:[%s319 + $0x18] sm:$0xff]
      %v324 = vld [vmem:[%s2] sm:$0xf]
      %v325 = vpack.c.bf16 %v317, %v315
      %v326 = vpack.c.bf16 %v318, %v316
      %v327 = vpack.c.bf16 %v322, %v320
      %v328 = vpack.c.bf16 %v323, %v321
      %v329 = vld [vmem:[%s3] sm:$0xff]
      %331 = vset.pattern.permute.xlu0 0
      %332 = vperm.xlu0 %331, %v329
      %v333 = vpop.permute.xlu0 %332
      %vm335 = vcmask 130048
      %v337 = vsel %vm335, %v324, 0
      %339 = vmatprep.subr.bf16.mxu0 0
      %340 = vmatpush1.bf16.msra.mxu0 0
      %341 = vmatprep.subr.bf16.mxu0 0
      %342 = vmatpush1.bf16.msra.mxu0 0
      %343 = vmatprep.subr.bf16.mxu0 0
      %344 = vmatpush1.bf16.msra.mxu0 0
      %345 = vmatprep.subr.bf16.mxu0 0
      %346 = vmatpush1.bf16.msra.mxu0 0
      %347 = vmatprep.subr.bf16.mxu0 0
      %348 = vmatpush1.bf16.msra.mxu0 0
      %349 = vmatprep.subr.bf16.mxu0 0
      %350 = vmatpush1.bf16.msra.mxu0 0
      %351 = vmatprep.subr.bf16.mxu0 0
      %352 = vmatpush1.bf16.msra.mxu0 0
      %353 = vmatprep.subr.bf16.mxu0 %v326
      %354 = vmatpush1.bf16.msra.mxu0 %v325
      %355 = vmatprep.subr.bf16.mxu0 0
      %356 = vmatpush2.bf16.msra.mxu0 0
      %357 = vmatprep.subr.bf16.mxu0 0
      %358 = vmatpush2.bf16.msra.mxu0 0
      %359 = vmatprep.subr.bf16.mxu0 0
      %360 = vmatpush2.bf16.msra.mxu0 0
      %361 = vmatprep.subr.bf16.mxu0 0
      %362 = vmatpush2.bf16.msra.mxu0 0
      %363 = vmatprep.subr.bf16.mxu0 0
      %364 = vmatpush2.bf16.msra.mxu0 0
      %365 = vmatprep.subr.bf16.mxu0 0
      %366 = vmatpush2.bf16.msra.mxu0 0
      %367 = vmatprep.subr.bf16.mxu0 0
      %368 = vmatpush2.bf16.msra.mxu0 0
      %369 = vmatprep.subr.bf16.mxu0 0
      %370 = vmatpush2.bf16.msra.mxu0 0
      %371 = vmatprep.mubr.bf16.mxu0 0
      %372 = vmatmul.mubr.bf16.gmra.mxu0 %v337
      %v373 = vpop.f32.mrf.mxu0
      %v374 = vadd.f32 %v333, %v373
      %v375 = vpop.f32.mrf.mxu0
      %v376 = vadd.f32 %v333, %v375
      %v377 = vpop.f32.mrf.mxu0
      %v378 = vpop.f32.mrf.mxu0
      %379 = vdwg.mxu0
      %380 = vmatprep.subr.bf16.mxu0 0
      %381 = vmatpush1.bf16.msra.mxu0 0
      %382 = vmatprep.subr.bf16.mxu0 0
      %383 = vmatpush1.bf16.msra.mxu0 0
      %384 = vmatprep.subr.bf16.mxu0 0
      %385 = vmatpush1.bf16.msra.mxu0 0
      %386 = vmatprep.subr.bf16.mxu0 0
      %387 = vmatpush1.bf16.msra.mxu0 0
      %388 = vmatprep.subr.bf16.mxu0 0
      %389 = vmatpush1.bf16.msra.mxu0 0
      %390 = vmatprep.subr.bf16.mxu0 0
      %391 = vmatpush1.bf16.msra.mxu0 0
      %392 = vmatprep.subr.bf16.mxu0 0
      %393 = vmatpush1.bf16.msra.mxu0 0
      %394 = vmatprep.subr.bf16.mxu0 %v328
      %395 = vmatpush1.bf16.msra.mxu0 %v327
      %396 = vmatprep.subr.bf16.mxu0 0
      %397 = vmatpush2.bf16.msra.mxu0 0
      %398 = vmatprep.subr.bf16.mxu0 0
      %399 = vmatpush2.bf16.msra.mxu0 0
      %400 = vmatprep.subr.bf16.mxu0 0
      %401 = vmatpush2.bf16.msra.mxu0 0
      %402 = vmatprep.subr.bf16.mxu0 0
      %403 = vmatpush2.bf16.msra.mxu0 0
      %404 = vmatprep.subr.bf16.mxu0 0
      %405 = vmatpush2.bf16.msra.mxu0 0
      %406 = vmatprep.subr.bf16.mxu0 0
      %407 = vmatpush2.bf16.msra.mxu0 0
      %408 = vmatprep.subr.bf16.mxu0 0
      %409 = vmatpush2.bf16.msra.mxu0 0
      %410 = vmatprep.subr.bf16.mxu0 0
      %411 = vmatpush2.bf16.msra.mxu0 0
      %412 = vmatprep.mubr.bf16.mxu0 0
      %413 = vmatmul.mubr.bf16.gmra.mxu0 %v337
      %v414 = vpop.f32.mrf.mxu0
      %v415 = vadd.f32 %v333, %v414
      %v416 = vpop.f32.mrf.mxu0
      %v417 = vadd.f32 %v333, %v416
      %v418 = vpop.f32.mrf.mxu0
      %v419 = vpop.f32.mrf.mxu0
      %420 = vdwg.mxu0
      %v421 = vmax.f32 %v374, 0.0
      %v422 = vmax.f32 %v376, 0.0
      %v423 = vmax.f32 %v415, 0.0
      %v424 = vmax.f32 %v417, 0.0
      %v425 = vpack.c.bf16 %v421, %v421
      %v426 = vpack.c.bf16 %v422, %v422
      %v427 = vpack.c.bf16 %v423, %v423
      %v428 = vpack.c.bf16 %v424, %v424
      %vm429 = vcmask 1044344
      %430 = vst.msk [vmem:[#allocation2] sm:$0xf] %vm429, 0
      %vm431 = vcmask 134144
      %432 = vst.msk [vmem:[#allocation2 + $0x14] sm:$0xf] %vm431, 0
      %v437 = vunpack.c.l.b16 %v425
      %v438 = vunpack.c.l.b16 %v426
      %v439 = vunpack.c.l.b16 %v427
      %v440 = vunpack.c.l.b16 %v428
      %v441 = vpack.c.b16 %v438, %v437
      %v442 = vpack.c.b16 %v440, %v439
      %445 = vst [vmem:[#allocation2 + $0x4] sm:$0xff] %v441
      %446 = vst [vmem:[#allocation2 + $0xc] sm:$0xff] %v442
      %v447 = vld [vmem:[#allocation2] sm:$0xff]
      %v448 = vld [vmem:[#allocation2 + $0x8] sm:$0xff]
      %v449 = vld [vmem:[#allocation2 + $0x10] sm:$0xf]
      %v450 = vld [vmem:[%s1] sm:$0x11]
      %v451 = vld [vmem:[%s1 + $0x8] sm:$0x11]
      %v454 = vunpack.c.l.b16 %v450
      %v455 = vunpack.c.h.b16 %v450
      %v456 = vunpack.c.l.b16 %v451
      %v457 = vunpack.c.h.b16 %v451
      %v458 = vpack.c.b16 %v454, %v454
      %v459 = vpack.c.b16 %v455, %v455
      %v460 = vpack.c.b16 %v456, %v456
      %v461 = vpack.c.b16 %v457, %v457
      %v463 = vpack.i.b16 %v458, %v458
      %v465 = vlaneseq
      %v466 = vshrl.u32 %v465, 7
      %v467 = vsub.s32 0, %v466
      %v468 = vrot.slane %v463, %v467
      %v470 = vpack.i.b16 %v459, %v459
      %v472 = vlaneseq
      %v473 = vshrl.u32 %v472, 7
      %v474 = vsub.s32 0, %v473
      %v475 = vrot.slane %v470, %v474
      %v477 = vpack.i.b16 %v460, %v460
      %v479 = vlaneseq
      %v480 = vshrl.u32 %v479, 7
      %v481 = vsub.s32 0, %v480
      %v482 = vrot.slane %v477, %v481
      %v484 = vpack.i.b16 %v461, %v461
      %v486 = vlaneseq
      %v487 = vshrl.u32 %v486, 7
      %v488 = vsub.s32 0, %v487
      %v489 = vrot.slane %v484, %v488
      %v494 = vunpack.c.l.b16 %v468
      %v495 = vunpack.c.l.b16 %v475
      %v496 = vunpack.c.l.b16 %v482
      %v497 = vunpack.c.l.b16 %v489
      %v498 = vpack.c.b16 %v495, %v494
      %v499 = vpack.c.b16 %v497, %v496
      %500 = vrot.lane.b32.xlu0 %v498, 111
      %v501 = vpop.permute.xlu0 %500
      %502 = vrot.lane.b32.xlu0 %v499, 111
      %v503 = vpop.permute.xlu0 %502
      %v504 = vrot.slane %v501, 4
      %v505 = vrot.slane %v503, 4
      %vm506 = vcmask 908288
      %v507 = vsel %vm506, %v504, %v501
      %vm508 = vcmask 1043456
      %v509 = vsel %vm508, %v504, %v505
      %v510 = vsel %vm506, %v509, %v503
      %v514 = vmul.bf16 %v447, %v507
      %v515 = vmul.bf16 %v448, %v510
      %v516 = vmul.bf16 %v449, %v505
      %v517 = vld [vmem:[%s4] sm:$0xf]
      %v518 = vshrl.u32 %v458, 16
      %v519 = vpack.i.b16 %v518, %v518
      %v521 = vlaneseq
      %v522 = vshrl.u32 %v521, 7
      %v523 = vsub.s32 0, %v522
      %v524 = vrot.slane %v519, %v523
      %v525 = vshrl.u32 %v459, 16
      %v526 = vpack.i.b16 %v525, %v525
      %v528 = vlaneseq
      %v529 = vshrl.u32 %v528, 7
      %v530 = vsub.s32 0, %v529
      %v531 = vrot.slane %v526, %v530
      %v532 = vshrl.u32 %v460, 16
      %v533 = vpack.i.b16 %v532, %v532
      %v535 = vlaneseq
      %v536 = vshrl.u32 %v535, 7
      %v537 = vsub.s32 0, %v536
      %v538 = vrot.slane %v533, %v537
      %v539 = vshrl.u32 %v461, 16
      %v540 = vpack.i.b16 %v539, %v539
      %v542 = vlaneseq
      %v543 = vshrl.u32 %v542, 7
      %v544 = vsub.s32 0, %v543
      %v545 = vrot.slane %v540, %v544
      %v550 = vunpack.c.l.b16 %v524
      %v551 = vunpack.c.l.b16 %v531
      %v552 = vunpack.c.l.b16 %v538
      %v553 = vunpack.c.l.b16 %v545
      %v554 = vpack.c.b16 %v551, %v550
      %v555 = vpack.c.b16 %v553, %v552
      %556 = vrot.lane.b32.xlu0 %v554, 112
      %v557 = vpop.permute.xlu0 %556
      %558 = vrot.lane.b32.xlu0 %v555, 112
      %v559 = vpop.permute.xlu0 %558
      %v560 = vrot.slane %v557, 4
      %v561 = vrot.slane %v559, 4
      %vm562 = vcmask 916480
      %v563 = vsel %vm562, %v560, %v557
      %v564 = vsel %vm508, %v560, %v561
      %v565 = vsel %vm562, %v564, %v559
      %v569 = vmul.bf16 %v447, %v563
      %v570 = vmul.bf16 %v448, %v565
      %v571 = vmul.bf16 %v449, %v561
      %s572 = scalar_lea.vmem %s4, 4
      %v573 = vld [vmem:[%s572] sm:$0xf]
      %v577 = vunpack.c.l.b16 %v569
      %v578 = vunpack.c.h.b16 %v569
      %v579 = vunpack.c.l.b16 %v570
      %v580 = vunpack.c.h.b16 %v570
      %v581 = vunpack.c.l.b16 %v571
      %v582 = vpack.c.b16 %v577, %v577
      %v583 = vpack.c.b16 %v578, %v578
      %v584 = vpack.c.b16 %v579, %v579
      %v585 = vpack.c.b16 %v580, %v580
      %v586 = vpack.c.b16 %v581, %v581
      %587 = vrot.lane.b32.xlu0 %v582, 16
      %v588 = vpop.permute.xlu0 %587
      %589 = vrot.lane.b32.xlu0 %v583, 16
      %v590 = vpop.permute.xlu0 %589
      %591 = vrot.lane.b32.xlu0 %v584, 16
      %v592 = vpop.permute.xlu0 %591
      %593 = vrot.lane.b32.xlu0 %v585, 16
      %v594 = vpop.permute.xlu0 %593
      %595 = vrot.lane.b32.xlu0 %v586, 16
      %v596 = vpop.permute.xlu0 %595
      %vm597 = vcmask 130048
      %v598 = vsel %vm597, %v588, %v590
      %v599 = vsel %vm597, %v590, %v592
      %v600 = vsel %vm597, %v592, %v594
      %v601 = vsel %vm597, %v594, %v596
      %vm602 = vcmask 64512
      %v604 = vsel %vm602, %v573, 0
      %vm606 = vcmask 1043456
      %v608 = vsel %vm606, %v598, 0
      %v611 = vsel %vm606, %v599, 0
      %v614 = vsel %vm606, %v600, 0
      %v617 = vsel %vm606, %v601, 0
      %619 = vmatprep.subr.bf16.mxu0 0
      %620 = vmatpush1.bf16.msra.mxu0 0
      %621 = vmatprep.subr.bf16.mxu0 0
      %622 = vmatpush1.bf16.msra.mxu0 0
      %623 = vmatprep.subr.bf16.mxu0 0
      %624 = vmatpush1.bf16.msra.mxu0 0
      %625 = vmatprep.subr.bf16.mxu0 0
      %626 = vmatpush1.bf16.msra.mxu0 0
      %627 = vmatprep.subr.bf16.mxu0 0
      %628 = vmatpush1.bf16.msra.mxu0 0
      %629 = vmatprep.subr.bf16.mxu0 0
      %630 = vmatpush1.bf16.msra.mxu0 0
      %631 = vmatprep.subr.bf16.mxu0 0
      %632 = vmatpush1.bf16.msra.mxu0 0
      %633 = vmatprep.subr.bf16.mxu0 %v611
      %634 = vmatpush1.bf16.msra.mxu0 %v608
      %635 = vmatprep.subr.bf16.mxu0 0
      %636 = vmatpush2.bf16.msra.mxu0 0
      %637 = vmatprep.subr.bf16.mxu0 0
      %638 = vmatpush2.bf16.msra.mxu0 0
      %639 = vmatprep.subr.bf16.mxu0 0
      %640 = vmatpush2.bf16.msra.mxu0 0
      %641 = vmatprep.subr.bf16.mxu0 0
      %642 = vmatpush2.bf16.msra.mxu0 0
      %643 = vmatprep.subr.bf16.mxu0 0
      %644 = vmatpush2.bf16.msra.mxu0 0
      %645 = vmatprep.subr.bf16.mxu0 0
      %646 = vmatpush2.bf16.msra.mxu0 0
      %647 = vmatprep.subr.bf16.mxu0 0
      %648 = vmatpush2.bf16.msra.mxu0 0
      %649 = vmatprep.subr.bf16.mxu0 0
      %650 = vmatpush2.bf16.msra.mxu0 0
      %651 = vmatprep.mubr.bf16.mxu0 0
      %652 = vmatmul.mubr.bf16.gmra.mxu0 %v604
      %v653 = vpop.f32.mrf.mxu0
      %v654 = vadd.f32 0.0, %v653
      %v655 = vpop.f32.mrf.mxu0
      %v656 = vadd.f32 0.0, %v655
      %v657 = vpop.f32.mrf.mxu0
      %v658 = vpop.f32.mrf.mxu0
      %659 = vdwg.mxu0
      %660 = vmatprep.subr.bf16.mxu0 0
      %661 = vmatpush1.bf16.msra.mxu0 0
      %662 = vmatprep.subr.bf16.mxu0 0
      %663 = vmatpush1.bf16.msra.mxu0 0
      %664 = vmatprep.subr.bf16.mxu0 0
      %665 = vmatpush1.bf16.msra.mxu0 0
      %666 = vmatprep.subr.bf16.mxu0 0
      %667 = vmatpush1.bf16.msra.mxu0 0
      %668 = vmatprep.subr.bf16.mxu0 0
      %669 = vmatpush1.bf16.msra.mxu0 0
      %670 = vmatprep.subr.bf16.mxu0 0
      %671 = vmatpush1.bf16.msra.mxu0 0
      %672 = vmatprep.subr.bf16.mxu0 0
      %673 = vmatpush1.bf16.msra.mxu0 0
      %674 = vmatprep.subr.bf16.mxu0 %v617
      %675 = vmatpush1.bf16.msra.mxu0 %v614
      %676 = vmatprep.subr.bf16.mxu0 0
      %677 = vmatpush2.bf16.msra.mxu0 0
      %678 = vmatprep.subr.bf16.mxu0 0
      %679 = vmatpush2.bf16.msra.mxu0 0
      %680 = vmatprep.subr.bf16.mxu0 0
      %681 = vmatpush2.bf16.msra.mxu0 0
      %682 = vmatprep.subr.bf16.mxu0 0
      %683 = vmatpush2.bf16.msra.mxu0 0
      %684 = vmatprep.subr.bf16.mxu0 0
      %685 = vmatpush2.bf16.msra.mxu0 0
      %686 = vmatprep.subr.bf16.mxu0 0
      %687 = vmatpush2.bf16.msra.mxu0 0
      %688 = vmatprep.subr.bf16.mxu0 0
      %689 = vmatpush2.bf16.msra.mxu0 0
      %690 = vmatprep.subr.bf16.mxu0 0
      %691 = vmatpush2.bf16.msra.mxu0 0
      %692 = vmatprep.mubr.bf16.mxu0 0
      %693 = vmatmul.mubr.bf16.gmra.mxu0 %v604
      %v694 = vpop.f32.mrf.mxu0
      %v695 = vadd.f32 0.0, %v694
      %v696 = vpop.f32.mrf.mxu0
      %v697 = vadd.f32 0.0, %v696
      %v698 = vpop.f32.mrf.mxu0
      %v699 = vpop.f32.mrf.mxu0
      %700 = vdwg.mxu0
      %v704 = vunpack.c.l.b16 %v514
      %v705 = vunpack.c.h.b16 %v514
      %v706 = vunpack.c.l.b16 %v515
      %v707 = vunpack.c.h.b16 %v515
      %v708 = vunpack.c.l.b16 %v516
      %v709 = vpack.c.b16 %v704, %v704
      %v710 = vpack.c.b16 %v705, %v705
      %v711 = vpack.c.b16 %v706, %v706
      %v712 = vpack.c.b16 %v707, %v707
      %v713 = vpack.c.b16 %v708, %v708
      %714 = vrot.lane.b32.xlu0 %v709, 17
      %v715 = vpop.permute.xlu0 %714
      %716 = vrot.lane.b32.xlu0 %v710, 17
      %v717 = vpop.permute.xlu0 %716
      %718 = vrot.lane.b32.xlu0 %v711, 17
      %v719 = vpop.permute.xlu0 %718
      %720 = vrot.lane.b32.xlu0 %v712, 17
      %v721 = vpop.permute.xlu0 %720
      %722 = vrot.lane.b32.xlu0 %v713, 17
      %v723 = vpop.permute.xlu0 %722
      %vm724 = vcmask 138240
      %v725 = vsel %vm724, %v715, %v717
      %v726 = vsel %vm724, %v717, %v719
      %v727 = vsel %vm724, %v719, %v721
      %v728 = vsel %vm724, %v721, %v723
      %v730 = vsel %vm602, %v517, 0
      %v733 = vsel %vm606, %v725, 0
      %v736 = vsel %vm606, %v726, 0
      %v739 = vsel %vm606, %v727, 0
      %v742 = vsel %vm606, %v728, 0
      %744 = vmatprep.subr.bf16.mxu0 0
      %745 = vmatpush1.bf16.msra.mxu0 0
      %746 = vmatprep.subr.bf16.mxu0 0
      %747 = vmatpush1.bf16.msra.mxu0 0
      %748 = vmatprep.subr.bf16.mxu0 0
      %749 = vmatpush1.bf16.msra.mxu0 0
      %750 = vmatprep.subr.bf16.mxu0 0
      %751 = vmatpush1.bf16.msra.mxu0 0
      %752 = vmatprep.subr.bf16.mxu0 0
      %753 = vmatpush1.bf16.msra.mxu0 0
      %754 = vmatprep.subr.bf16.mxu0 0
      %755 = vmatpush1.bf16.msra.mxu0 0
      %756 = vmatprep.subr.bf16.mxu0 0
      %757 = vmatpush1.bf16.msra.mxu0 0
      %758 = vmatprep.subr.bf16.mxu0 %v736
      %759 = vmatpush1.bf16.msra.mxu0 %v733
      %760 = vmatprep.subr.bf16.mxu0 0
      %761 = vmatpush2.bf16.msra.mxu0 0
      %762 = vmatprep.subr.bf16.mxu0 0
      %763 = vmatpush2.bf16.msra.mxu0 0
      %764 = vmatprep.subr.bf16.mxu0 0
      %765 = vmatpush2.bf16.msra.mxu0 0
      %766 = vmatprep.subr.bf16.mxu0 0
      %767 = vmatpush2.bf16.msra.mxu0 0
      %768 = vmatprep.subr.bf16.mxu0 0
      %769 = vmatpush2.bf16.msra.mxu0 0
      %770 = vmatprep.subr.bf16.mxu0 0
      %771 = vmatpush2.bf16.msra.mxu0 0
      %772 = vmatprep.subr.bf16.mxu0 0
      %773 = vmatpush2.bf16.msra.mxu0 0
      %774 = vmatprep.subr.bf16.mxu0 0
      %775 = vmatpush2.bf16.msra.mxu0 0
      %776 = vmatprep.mubr.bf16.mxu0 0
      %777 = vmatmul.mubr.bf16.gmra.mxu0 %v730
      %v778 = vpop.f32.mrf.mxu0
      %v779 = vadd.f32 %v654, %v778
      %v780 = vpop.f32.mrf.mxu0
      %v781 = vadd.f32 %v656, %v780
      %v782 = vpop.f32.mrf.mxu0
      %v783 = vpop.f32.mrf.mxu0
      %784 = vdwg.mxu0
      %785 = vmatprep.subr.bf16.mxu0 0
      %786 = vmatpush1.bf16.msra.mxu0 0
      %787 = vmatprep.subr.bf16.mxu0 0
      %788 = vmatpush1.bf16.msra.mxu0 0
      %789 = vmatprep.subr.bf16.mxu0 0
      %790 = vmatpush1.bf16.msra.mxu0 0
      %791 = vmatprep.subr.bf16.mxu0 0
      %792 = vmatpush1.bf16.msra.mxu0 0
      %793 = vmatprep.subr.bf16.mxu0 0
      %794 = vmatpush1.bf16.msra.mxu0 0
      %795 = vmatprep.subr.bf16.mxu0 0
      %796 = vmatpush1.bf16.msra.mxu0 0
      %797 = vmatprep.subr.bf16.mxu0 0
      %798 = vmatpush1.bf16.msra.mxu0 0
      %799 = vmatprep.subr.bf16.mxu0 %v742
      %800 = vmatpush1.bf16.msra.mxu0 %v739
      %801 = vmatprep.subr.bf16.mxu0 0
      %802 = vmatpush2.bf16.msra.mxu0 0
      %803 = vmatprep.subr.bf16.mxu0 0
      %804 = vmatpush2.bf16.msra.mxu0 0
      %805 = vmatprep.subr.bf16.mxu0 0
      %806 = vmatpush2.bf16.msra.mxu0 0
      %807 = vmatprep.subr.bf16.mxu0 0
      %808 = vmatpush2.bf16.msra.mxu0 0
      %809 = vmatprep.subr.bf16.mxu0 0
      %810 = vmatpush2.bf16.msra.mxu0 0
      %811 = vmatprep.subr.bf16.mxu0 0
      %812 = vmatpush2.bf16.msra.mxu0 0
      %813 = vmatprep.subr.bf16.mxu0 0
      %814 = vmatpush2.bf16.msra.mxu0 0
      %815 = vmatprep.subr.bf16.mxu0 0
      %816 = vmatpush2.bf16.msra.mxu0 0
      %817 = vmatprep.mubr.bf16.mxu0 0
      %818 = vmatmul.mubr.bf16.gmra.mxu0 %v730
      %v819 = vpop.f32.mrf.mxu0
      %v820 = vadd.f32 %v695, %v819
      %v821 = vpop.f32.mrf.mxu0
      %v822 = vadd.f32 %v697, %v821
      %v823 = vpop.f32.mrf.mxu0
      %v824 = vpop.f32.mrf.mxu0
      %825 = vdwg.mxu0
      %v826 = vld [vmem:[%s1] sm:$0x22]
      %v827 = vld [vmem:[%s1 + $0x8] sm:$0x22]
      %v830 = vunpack.c.l.b16 %v826
      %v831 = vunpack.c.h.b16 %v826
      %v832 = vunpack.c.l.b16 %v827
      %v833 = vunpack.c.h.b16 %v827
      %v834 = vpack.c.b16 %v830, %v830
      %v835 = vpack.c.b16 %v831, %v831
      %v836 = vpack.c.b16 %v832, %v832
      %v837 = vpack.c.b16 %v833, %v833
      %v839 = vpack.i.b16 %v834, %v834
      %v841 = vlaneseq
      %v842 = vshrl.u32 %v841, 7
      %v843 = vsub.s32 1, %v842
      %v844 = vrot.slane %v839, %v843
      %v846 = vpack.i.b16 %v835, %v835
      %v848 = vlaneseq
      %v849 = vshrl.u32 %v848, 7
      %v850 = vsub.s32 1, %v849
      %v851 = vrot.slane %v846, %v850
      %v853 = vpack.i.b16 %v836, %v836
      %v855 = vlaneseq
      %v856 = vshrl.u32 %v855, 7
      %v857 = vsub.s32 1, %v856
      %v858 = vrot.slane %v853, %v857
      %v860 = vpack.i.b16 %v837, %v837
      %v862 = vlaneseq
      %v863 = vshrl.u32 %v862, 7
      %v864 = vsub.s32 1, %v863
      %v865 = vrot.slane %v860, %v864
      %v870 = vunpack.c.l.b16 %v844
      %v871 = vunpack.c.l.b16 %v851
      %v872 = vunpack.c.l.b16 %v858
      %v873 = vunpack.c.l.b16 %v865
      %v874 = vpack.c.b16 %v871, %v870
      %v875 = vpack.c.b16 %v873, %v872
      %876 = vrot.lane.b32.xlu0 %v874, 113
      %v877 = vpop.permute.xlu0 %876
      %878 = vrot.lane.b32.xlu0 %v875, 113
      %v879 = vpop.permute.xlu0 %878
      %v880 = vrot.slane %v877, 4
      %v881 = vrot.slane %v879, 4
      %vm882 = vcmask 924672
      %v883 = vsel %vm882, %v880, %v877
      %v884 = vsel %vm508, %v880, %v881
      %v885 = vsel %vm882, %v884, %v879
      %v889 = vmul.bf16 %v447, %v883
      %v890 = vmul.bf16 %v448, %v885
      %v891 = vmul.bf16 %v449, %v881
      %s892 = scalar_lea.vmem %s4, 8
      %v893 = vld [vmem:[%s892] sm:$0xf]
      %v897 = vunpack.c.l.b16 %v889
      %v898 = vunpack.c.h.b16 %v889
      %v899 = vunpack.c.l.b16 %v890
      %v900 = vunpack.c.h.b16 %v890
      %v901 = vunpack.c.l.b16 %v891
      %v902 = vpack.c.b16 %v897, %v897
      %v903 = vpack.c.b16 %v898, %v898
      %v904 = vpack.c.b16 %v899, %v899
      %v905 = vpack.c.b16 %v900, %v900
      %v906 = vpack.c.b16 %v901, %v901
      %907 = vrot.lane.b32.xlu0 %v902, 15
      %v908 = vpop.permute.xlu0 %907
      %909 = vrot.lane.b32.xlu0 %v903, 15
      %v910 = vpop.permute.xlu0 %909
      %911 = vrot.lane.b32.xlu0 %v904, 15
      %v912 = vpop.permute.xlu0 %911
      %913 = vrot.lane.b32.xlu0 %v905, 15
      %v914 = vpop.permute.xlu0 %913
      %915 = vrot.lane.b32.xlu0 %v906, 15
      %v916 = vpop.permute.xlu0 %915
      %vm917 = vcmask 121856
      %v918 = vsel %vm917, %v908, %v910
      %v919 = vsel %vm917, %v910, %v912
      %v920 = vsel %vm917, %v912, %v914
      %v921 = vsel %vm917, %v914, %v916
      %v923 = vsel %vm602, %v893, 0
      %v926 = vsel %vm606, %v918, 0
      %v929 = vsel %vm606, %v919, 0
      %v932 = vsel %vm606, %v920, 0
      %v935 = vsel %vm606, %v921, 0
      %937 = vmatprep.subr.bf16.mxu0 0
      %938 = vmatpush1.bf16.msra.mxu0 0
      %939 = vmatprep.subr.bf16.mxu0 0
      %940 = vmatpush1.bf16.msra.mxu0 0
      %941 = vmatprep.subr.bf16.mxu0 0
      %942 = vmatpush1.bf16.msra.mxu0 0
      %943 = vmatprep.subr.bf16.mxu0 0
      %944 = vmatpush1.bf16.msra.mxu0 0
      %945 = vmatprep.subr.bf16.mxu0 0
      %946 = vmatpush1.bf16.msra.mxu0 0
      %947 = vmatprep.subr.bf16.mxu0 0
      %948 = vmatpush1.bf16.msra.mxu0 0
      %949 = vmatprep.subr.bf16.mxu0 0
      %950 = vmatpush1.bf16.msra.mxu0 0
      %951 = vmatprep.subr.bf16.mxu0 %v929
      %952 = vmatpush1.bf16.msra.mxu0 %v926
      %953 = vmatprep.subr.bf16.mxu0 0
      %954 = vmatpush2.bf16.msra.mxu0 0
      %955 = vmatprep.subr.bf16.mxu0 0
      %956 = vmatpush2.bf16.msra.mxu0 0
      %957 = vmatprep.subr.bf16.mxu0 0
      %958 = vmatpush2.bf16.msra.mxu0 0
      %959 = vmatprep.subr.bf16.mxu0 0
      %960 = vmatpush2.bf16.msra.mxu0 0
      %961 = vmatprep.subr.bf16.mxu0 0
      %962 = vmatpush2.bf16.msra.mxu0 0
      %963 = vmatprep.subr.bf16.mxu0 0
      %964 = vmatpush2.bf16.msra.mxu0 0
      %965 = vmatprep.subr.bf16.mxu0 0
      %966 = vmatpush2.bf16.msra.mxu0 0
      %967 = vmatprep.subr.bf16.mxu0 0
      %968 = vmatpush2.bf16.msra.mxu0 0
      %969 = vmatprep.mubr.bf16.mxu0 0
      %970 = vmatmul.mubr.bf16.gmra.mxu0 %v923
      %v971 = vpop.f32.mrf.mxu0
      %v972 = vadd.f32 0.0, %v971
      %v973 = vpop.f32.mrf.mxu0
      %v974 = vadd.f32 0.0, %v973
      %v975 = vpop.f32.mrf.mxu0
      %v976 = vpop.f32.mrf.mxu0
      %977 = vdwg.mxu0
      %978 = vmatprep.subr.bf16.mxu0 0
      %979 = vmatpush1.bf16.msra.mxu0 0
      %980 = vmatprep.subr.bf16.mxu0 0
      %981 = vmatpush1.bf16.msra.mxu0 0
      %982 = vmatprep.subr.bf16.mxu0 0
      %983 = vmatpush1.bf16.msra.mxu0 0
      %984 = vmatprep.subr.bf16.mxu0 0
      %985 = vmatpush1.bf16.msra.mxu0 0
      %986 = vmatprep.subr.bf16.mxu0 0
      %987 = vmatpush1.bf16.msra.mxu0 0
      %988 = vmatprep.subr.bf16.mxu0 0
      %989 = vmatpush1.bf16.msra.mxu0 0
      %990 = vmatprep.subr.bf16.mxu0 0
      %991 = vmatpush1.bf16.msra.mxu0 0
      %992 = vmatprep.subr.bf16.mxu0 %v935
      %993 = vmatpush1.bf16.msra.mxu0 %v932
      %994 = vmatprep.subr.bf16.mxu0 0
      %995 = vmatpush2.bf16.msra.mxu0 0
      %996 = vmatprep.subr.bf16.mxu0 0
      %997 = vmatpush2.bf16.msra.mxu0 0
      %998 = vmatprep.subr.bf16.mxu0 0
      %999 = vmatpush2.bf16.msra.mxu0 0
      %1000 = vmatprep.subr.bf16.mxu0 0
      %1001 = vmatpush2.bf16.msra.mxu0 0
      %1002 = vmatprep.subr.bf16.mxu0 0
      %1003 = vmatpush2.bf16.msra.mxu0 0
      %1004 = vmatprep.subr.bf16.mxu0 0
      %1005 = vmatpush2.bf16.msra.mxu0 0
      %1006 = vmatprep.subr.bf16.mxu0 0
      %1007 = vmatpush2.bf16.msra.mxu0 0
      %1008 = vmatprep.subr.bf16.mxu0 0
      %1009 = vmatpush2.bf16.msra.mxu0 0
      %1010 = vmatprep.mubr.bf16.mxu0 0
      %1011 = vmatmul.mubr.bf16.gmra.mxu0 %v923
      %v1012 = vpop.f32.mrf.mxu0
      %v1013 = vadd.f32 0.0, %v1012
      %v1014 = vpop.f32.mrf.mxu0
      %v1015 = vadd.f32 0.0, %v1014
      %v1016 = vpop.f32.mrf.mxu0
      %v1017 = vpop.f32.mrf.mxu0
      %1018 = vdwg.mxu0
      %v1019 = vadd.f32 %v779, %v972
      %v1020 = vadd.f32 %v781, %v974
      %v1021 = vadd.f32 %v820, %v1013
      %v1022 = vadd.f32 %v822, %v1015
      %v1023 = vshrl.u32 %v834, 16
      %v1024 = vpack.i.b16 %v1023, %v1023
      %v1026 = vlaneseq
      %v1027 = vshrl.u32 %v1026, 7
      %v1028 = vsub.s32 1, %v1027
      %v1029 = vrot.slane %v1024, %v1028
      %v1030 = vshrl.u32 %v835, 16
      %v1031 = vpack.i.b16 %v1030, %v1030
      %v1033 = vlaneseq
      %v1034 = vshrl.u32 %v1033, 7
      %v1035 = vsub.s32 1, %v1034
      %v1036 = vrot.slane %v1031, %v1035
      %v1037 = vshrl.u32 %v836, 16
      %v1038 = vpack.i.b16 %v1037, %v1037
      %v1040 = vlaneseq
      %v1041 = vshrl.u32 %v1040, 7
      %v1042 = vsub.s32 1, %v1041
      %v1043 = vrot.slane %v1038, %v1042
      %v1044 = vshrl.u32 %v837, 16
      %v1045 = vpack.i.b16 %v1044, %v1044
      %v1047 = vlaneseq
      %v1048 = vshrl.u32 %v1047, 7
      %v1049 = vsub.s32 1, %v1048
      %v1050 = vrot.slane %v1045, %v1049
      %v1055 = vunpack.c.l.b16 %v1029
      %v1056 = vunpack.c.l.b16 %v1036
      %v1057 = vunpack.c.l.b16 %v1043
      %v1058 = vunpack.c.l.b16 %v1050
      %v1059 = vpack.c.b16 %v1056, %v1055
      %v1060 = vpack.c.b16 %v1058, %v1057
      %1061 = vrot.lane.b32.xlu0 %v1059, 127
      %v1062 = vpop.permute.xlu0 %1061
      %1063 = vrot.lane.b32.xlu0 %v1060, 127
      %v1064 = vpop.permute.xlu0 %1063
      %v1065 = vrot.slane %v1062, 4
      %v1066 = vrot.slane %v1064, 4
      %vm1067 = vcmask 1039360
      %v1068 = vsel %vm1067, %v1065, %v1062
      %v1069 = vsel %vm508, %v1065, %v1066
      %v1070 = vsel %vm1067, %v1069, %v1064
      %v1074 = vmul.bf16 %v447, %v1068
      %v1075 = vmul.bf16 %v448, %v1070
      %v1076 = vmul.bf16 %v449, %v1066
      %s1077 = scalar_lea.vmem %s4, 12
      %v1078 = vld [vmem:[%s1077] sm:$0xf]
      %v1082 = vunpack.c.l.b16 %v1074
      %v1083 = vunpack.c.h.b16 %v1074
      %v1084 = vunpack.c.l.b16 %v1075
      %v1085 = vunpack.c.h.b16 %v1075
      %v1086 = vunpack.c.l.b16 %v1076
      %v1087 = vpack.c.b16 %v1082, %v1082
      %v1088 = vpack.c.b16 %v1083, %v1083
      %v1089 = vpack.c.b16 %v1084, %v1084
      %v1090 = vpack.c.b16 %v1085, %v1085
      %v1091 = vpack.c.b16 %v1086, %v1086
      %1092 = vrot.lane.b32.xlu0 %v1087, 1
      %v1093 = vpop.permute.xlu0 %1092
      %1094 = vrot.lane.b32.xlu0 %v1088, 1
      %v1095 = vpop.permute.xlu0 %1094
      %1096 = vrot.lane.b32.xlu0 %v1089, 1
      %v1097 = vpop.permute.xlu0 %1096
      %1098 = vrot.lane.b32.xlu0 %v1090, 1
      %v1099 = vpop.permute.xlu0 %1098
      %1100 = vrot.lane.b32.xlu0 %v1091, 1
      %v1101 = vpop.permute.xlu0 %1100
      %vm1102 = vcmask 7168
      %v1103 = vsel %vm1102, %v1093, %v1095
      %v1104 = vsel %vm1102, %v1095, %v1097
      %v1105 = vsel %vm1102, %v1097, %v1099
      %v1106 = vsel %vm1102, %v1099, %v1101
      %v1108 = vsel %vm602, %v1078, 0
      %v1111 = vsel %vm606, %v1103, 0
      %v1114 = vsel %vm606, %v1104, 0
      %v1117 = vsel %vm606, %v1105, 0
      %v1120 = vsel %vm606, %v1106, 0
      %1122 = vmatprep.subr.bf16.mxu0 0
      %1123 = vmatpush1.bf16.msra.mxu0 0
      %1124 = vmatprep.subr.bf16.mxu0 0
      %1125 = vmatpush1.bf16.msra.mxu0 0
      %1126 = vmatprep.subr.bf16.mxu0 0
      %1127 = vmatpush1.bf16.msra.mxu0 0
      %1128 = vmatprep.subr.bf16.mxu0 0
      %1129 = vmatpush1.bf16.msra.mxu0 0
      %1130 = vmatprep.subr.bf16.mxu0 0
      %1131 = vmatpush1.bf16.msra.mxu0 0
      %1132 = vmatprep.subr.bf16.mxu0 0
      %1133 = vmatpush1.bf16.msra.mxu0 0
      %1134 = vmatprep.subr.bf16.mxu0 0
      %1135 = vmatpush1.bf16.msra.mxu0 0
      %1136 = vmatprep.subr.bf16.mxu0 %v1114
      %1137 = vmatpush1.bf16.msra.mxu0 %v1111
      %1138 = vmatprep.subr.bf16.mxu0 0
      %1139 = vmatpush2.bf16.msra.mxu0 0
      %1140 = vmatprep.subr.bf16.mxu0 0
      %1141 = vmatpush2.bf16.msra.mxu0 0
      %1142 = vmatprep.subr.bf16.mxu0 0
      %1143 = vmatpush2.bf16.msra.mxu0 0
      %1144 = vmatprep.subr.bf16.mxu0 0
      %1145 = vmatpush2.bf16.msra.mxu0 0
      %1146 = vmatprep.subr.bf16.mxu0 0
      %1147 = vmatpush2.bf16.msra.mxu0 0
      %1148 = vmatprep.subr.bf16.mxu0 0
      %1149 = vmatpush2.bf16.msra.mxu0 0
      %1150 = vmatprep.subr.bf16.mxu0 0
      %1151 = vmatpush2.bf16.msra.mxu0 0
      %1152 = vmatprep.subr.bf16.mxu0 0
      %1153 = vmatpush2.bf16.msra.mxu0 0
      %1154 = vmatprep.mubr.bf16.mxu0 0
      %1155 = vmatmul.mubr.bf16.gmra.mxu0 %v1108
      %v1156 = vpop.f32.mrf.mxu0
      %v1157 = vadd.f32 0.0, %v1156
      %v1158 = vpop.f32.mrf.mxu0
      %v1159 = vadd.f32 0.0, %v1158
      %v1160 = vpop.f32.mrf.mxu0
      %v1161 = vpop.f32.mrf.mxu0
      %1162 = vdwg.mxu0
      %1163 = vmatprep.subr.bf16.mxu0 0
      %1164 = vmatpush1.bf16.msra.mxu0 0
      %1165 = vmatprep.subr.bf16.mxu0 0
      %1166 = vmatpush1.bf16.msra.mxu0 0
      %1167 = vmatprep.subr.bf16.mxu0 0
      %1168 = vmatpush1.bf16.msra.mxu0 0
      %1169 = vmatprep.subr.bf16.mxu0 0
      %1170 = vmatpush1.bf16.msra.mxu0 0
      %1171 = vmatprep.subr.bf16.mxu0 0
      %1172 = vmatpush1.bf16.msra.mxu0 0
      %1173 = vmatprep.subr.bf16.mxu0 0
      %1174 = vmatpush1.bf16.msra.mxu0 0
      %1175 = vmatprep.subr.bf16.mxu0 0
      %1176 = vmatpush1.bf16.msra.mxu0 0
      %1177 = vmatprep.subr.bf16.mxu0 %v1120
      %1178 = vmatpush1.bf16.msra.mxu0 %v1117
      %1179 = vmatprep.subr.bf16.mxu0 0
      %1180 = vmatpush2.bf16.msra.mxu0 0
      %1181 = vmatprep.subr.bf16.mxu0 0
      %1182 = vmatpush2.bf16.msra.mxu0 0
      %1183 = vmatprep.subr.bf16.mxu0 0
      %1184 = vmatpush2.bf16.msra.mxu0 0
      %1185 = vmatprep.subr.bf16.mxu0 0
      %1186 = vmatpush2.bf16.msra.mxu0 0
      %1187 = vmatprep.subr.bf16.mxu0 0
      %1188 = vmatpush2.bf16.msra.mxu0 0
      %1189 = vmatprep.subr.bf16.mxu0 0
      %1190 = vmatpush2.bf16.msra.mxu0 0
      %1191 = vmatprep.subr.bf16.mxu0 0
      %1192 = vmatpush2.bf16.msra.mxu0 0
      %1193 = vmatprep.subr.bf16.mxu0 0
      %1194 = vmatpush2.bf16.msra.mxu0 0
      %1195 = vmatprep.mubr.bf16.mxu0 0
      %1196 = vmatmul.mubr.bf16.gmra.mxu0 %v1108
      %v1197 = vpop.f32.mrf.mxu0
      %v1198 = vadd.f32 0.0, %v1197
      %v1199 = vpop.f32.mrf.mxu0
      %v1200 = vadd.f32 0.0, %v1199
      %v1201 = vpop.f32.mrf.mxu0
      %v1202 = vpop.f32.mrf.mxu0
      %1203 = vdwg.mxu0
      %v1204 = vadd.f32 %v1019, %v1157
      %v1205 = vadd.f32 %v1020, %v1159
      %v1206 = vadd.f32 %v1021, %v1198
      %v1207 = vadd.f32 %v1022, %v1200
      %s1208 = scalar_lea.vmem %s4, 16
      %v1209 = vld [vmem:[%s1208] sm:$0xf]
      %v1211 = vsel %vm602, %v1209, 0
      %v1214 = vsel %vm606, %v425, 0
      %v1217 = vsel %vm606, %v426, 0
      %v1220 = vsel %vm606, %v427, 0
      %v1223 = vsel %vm606, %v428, 0
      %1225 = vmatprep.subr.bf16.mxu0 0
      %1226 = vmatpush1.bf16.msra.mxu0 0
      %1227 = vmatprep.subr.bf16.mxu0 0
      %1228 = vmatpush1.bf16.msra.mxu0 0
      %1229 = vmatprep.subr.bf16.mxu0 0
      %1230 = vmatpush1.bf16.msra.mxu0 0
      %1231 = vmatprep.subr.bf16.mxu0 0
      %1232 = vmatpush1.bf16.msra.mxu0 0
      %1233 = vmatprep.subr.bf16.mxu0 0
      %1234 = vmatpush1.bf16.msra.mxu0 0
      %1235 = vmatprep.subr.bf16.mxu0 0
      %1236 = vmatpush1.bf16.msra.mxu0 0
      %1237 = vmatprep.subr.bf16.mxu0 0
      %1238 = vmatpush1.bf16.msra.mxu0 0
      %1239 = vmatprep.subr.bf16.mxu0 %v1217
      %1240 = vmatpush1.bf16.msra.mxu0 %v1214
      %1241 = vmatprep.subr.bf16.mxu0 0
      %1242 = vmatpush2.bf16.msra.mxu0 0
      %1243 = vmatprep.subr.bf16.mxu0 0
      %1244 = vmatpush2.bf16.msra.mxu0 0
      %1245 = vmatprep.subr.bf16.mxu0 0
      %1246 = vmatpush2.bf16.msra.mxu0 0
      %1247 = vmatprep.subr.bf16.mxu0 0
      %1248 = vmatpush2.bf16.msra.mxu0 0
      %1249 = vmatprep.subr.bf16.mxu0 0
      %1250 = vmatpush2.bf16.msra.mxu0 0
      %1251 = vmatprep.subr.bf16.mxu0 0
      %1252 = vmatpush2.bf16.msra.mxu0 0
      %1253 = vmatprep.subr.bf16.mxu0 0
      %1254 = vmatpush2.bf16.msra.mxu0 0
      %1255 = vmatprep.subr.bf16.mxu0 0
      %1256 = vmatpush2.bf16.msra.mxu0 0
      %1257 = vmatprep.mubr.bf16.mxu0 0
      %1258 = vmatmul.mubr.bf16.gmra.mxu0 %v1211
      %v1259 = vpop.f32.mrf.mxu0
      %v1260 = vadd.f32 0.0, %v1259
      %v1261 = vpop.f32.mrf.mxu0
      %v1262 = vadd.f32 0.0, %v1261
      %v1263 = vpop.f32.mrf.mxu0
      %v1264 = vpop.f32.mrf.mxu0
      %1265 = vdwg.mxu0
      %1266 = vmatprep.subr.bf16.mxu0 0
      %1267 = vmatpush1.bf16.msra.mxu0 0
      %1268 = vmatprep.subr.bf16.mxu0 0
      %1269 = vmatpush1.bf16.msra.mxu0 0
      %1270 = vmatprep.subr.bf16.mxu0 0
      %1271 = vmatpush1.bf16.msra.mxu0 0
      %1272 = vmatprep.subr.bf16.mxu0 0
      %1273 = vmatpush1.bf16.msra.mxu0 0
      %1274 = vmatprep.subr.bf16.mxu0 0
      %1275 = vmatpush1.bf16.msra.mxu0 0
      %1276 = vmatprep.subr.bf16.mxu0 0
      %1277 = vmatpush1.bf16.msra.mxu0 0
      %1278 = vmatprep.subr.bf16.mxu0 0
      %1279 = vmatpush1.bf16.msra.mxu0 0
      %1280 = vmatprep.subr.bf16.mxu0 %v1223
      %1281 = vmatpush1.bf16.msra.mxu0 %v1220
      %1282 = vmatprep.subr.bf16.mxu0 0
      %1283 = vmatpush2.bf16.msra.mxu0 0
      %1284 = vmatprep.subr.bf16.mxu0 0
      %1285 = vmatpush2.bf16.msra.mxu0 0
      %1286 = vmatprep.subr.bf16.mxu0 0
      %1287 = vmatpush2.bf16.msra.mxu0 0
      %1288 = vmatprep.subr.bf16.mxu0 0
      %1289 = vmatpush2.bf16.msra.mxu0 0
      %1290 = vmatprep.subr.bf16.mxu0 0
      %1291 = vmatpush2.bf16.msra.mxu0 0
      %1292 = vmatprep.subr.bf16.mxu0 0
      %1293 = vmatpush2.bf16.msra.mxu0 0
      %1294 = vmatprep.subr.bf16.mxu0 0
      %1295 = vmatpush2.bf16.msra.mxu0 0
      %1296 = vmatprep.subr.bf16.mxu0 0
      %1297 = vmatpush2.bf16.msra.mxu0 0
      %1298 = vmatprep.mubr.bf16.mxu0 0
      %1299 = vmatmul.mubr.bf16.gmra.mxu0 %v1211
      %v1300 = vpop.f32.mrf.mxu0
      %v1301 = vadd.f32 0.0, %v1300
      %v1302 = vpop.f32.mrf.mxu0
      %v1303 = vadd.f32 0.0, %v1302
      %v1304 = vpop.f32.mrf.mxu0
      %v1305 = vpop.f32.mrf.mxu0
      %1306 = vdwg.mxu0
      %v1307 = vadd.f32 %v1204, %v1260
      %v1308 = vadd.f32 %v1205, %v1262
      %v1309 = vadd.f32 %v1206, %v1301
      %v1310 = vadd.f32 %v1207, %v1303
      %v1311 = vld [vmem:[#allocation2 + $0x4] sm:$0xff]
      %v1312 = vld [vmem:[#allocation2 + $0xc] sm:$0xff]
      %v1313 = vld [vmem:[#allocation2 + $0x14] sm:$0xf]
      %v1314 = vld [vmem:[%s1] sm:$0x44]
      %v1315 = vld [vmem:[%s1 + $0x8] sm:$0x44]
      %v1318 = vunpack.c.l.b16 %v1314
      %v1319 = vunpack.c.h.b16 %v1314
      %v1320 = vunpack.c.l.b16 %v1315
      %v1321 = vunpack.c.h.b16 %v1315
      %v1322 = vpack.c.b16 %v1318, %v1318
      %v1323 = vpack.c.b16 %v1319, %v1319
      %v1324 = vpack.c.b16 %v1320, %v1320
      %v1325 = vpack.c.b16 %v1321, %v1321
      %v1327 = vshrl.u32 %v1322, 16
      %v1328 = vpack.i.b16 %v1327, %v1327
      %v1330 = vlaneseq
      %v1331 = vshrl.u32 %v1330, 7
      %v1332 = vsub.s32 2, %v1331
      %v1333 = vrot.slane %v1328, %v1332
      %v1335 = vshrl.u32 %v1323, 16
      %v1336 = vpack.i.b16 %v1335, %v1335
      %v1338 = vlaneseq
      %v1339 = vshrl.u32 %v1338, 7
      %v1340 = vsub.s32 2, %v1339
      %v1341 = vrot.slane %v1336, %v1340
      %v1343 = vshrl.u32 %v1324, 16
      %v1344 = vpack.i.b16 %v1343, %v1343
      %v1346 = vlaneseq
      %v1347 = vshrl.u32 %v1346, 7
      %v1348 = vsub.s32 2, %v1347
      %v1349 = vrot.slane %v1344, %v1348
      %v1351 = vshrl.u32 %v1325, 16
      %v1352 = vpack.i.b16 %v1351, %v1351
      %v1354 = vlaneseq
      %v1355 = vshrl.u32 %v1354, 7
      %v1356 = vsub.s32 2, %v1355
      %v1357 = vrot.slane %v1352, %v1356
      %v1362 = vunpack.c.l.b16 %v1333
      %v1363 = vunpack.c.l.b16 %v1341
      %v1364 = vunpack.c.l.b16 %v1349
      %v1365 = vunpack.c.l.b16 %v1357
      %v1366 = vpack.c.b16 %v1363, %v1362
      %v1367 = vpack.c.b16 %v1365, %v1364
      %1368 = vrot.lane.b32.xlu0 %v1366, 1
      %v1369 = vpop.permute.xlu0 %1368
      %1370 = vrot.lane.b32.xlu0 %v1367, 1
      %v1371 = vpop.permute.xlu0 %1370
      %v1372 = vrot.slane %v1369, 4
      %v1373 = vrot.slane %v1371, 4
      %v1374 = vsel %vm1102, %v1372, %v1369
      %v1375 = vsel %vm508, %v1372, %v1373
      %v1376 = vsel %vm1102, %v1375, %v1371
      %v1380 = vmul.bf16 %v1311, %v1374
      %v1381 = vmul.bf16 %v1312, %v1376
      %v1382 = vmul.bf16 %v1313, %v1373
      %s1383 = scalar_lea.vmem %s4, 20
      %v1384 = vld [vmem:[%s1383] sm:$0xf]
      %v1388 = vunpack.c.l.b16 %v1380
      %v1389 = vunpack.c.h.b16 %v1380
      %v1390 = vunpack.c.l.b16 %v1381
      %v1391 = vunpack.c.h.b16 %v1381
      %v1392 = vunpack.c.l.b16 %v1382
      %v1393 = vpack.c.b16 %v1388, %v1388
      %v1394 = vpack.c.b16 %v1389, %v1389
      %v1395 = vpack.c.b16 %v1390, %v1390
      %v1396 = vpack.c.b16 %v1391, %v1391
      %v1397 = vpack.c.b16 %v1392, %v1392
      %1398 = vrot.lane.b32.xlu0 %v1393, 127
      %v1399 = vpop.permute.xlu0 %1398
      %1400 = vrot.lane.b32.xlu0 %v1394, 127
      %v1401 = vpop.permute.xlu0 %1400
      %1402 = vrot.lane.b32.xlu0 %v1395, 127
      %v1403 = vpop.permute.xlu0 %1402
      %1404 = vrot.lane.b32.xlu0 %v1396, 127
      %v1405 = vpop.permute.xlu0 %1404
      %1406 = vrot.lane.b32.xlu0 %v1397, 127
      %v1407 = vpop.permute.xlu0 %1406
      %v1408 = vsel %vm1067, %v1399, %v1401
      %v1409 = vsel %vm1067, %v1401, %v1403
      %v1410 = vsel %vm1067, %v1403, %v1405
      %v1411 = vsel %vm1067, %v1405, %v1407
      %v1413 = vsel %vm602, %v1384, 0
      %v1416 = vsel %vm606, %v1408, 0
      %v1419 = vsel %vm606, %v1409, 0
      %v1422 = vsel %vm606, %v1410, 0
      %v1425 = vsel %vm606, %v1411, 0
      %1427 = vmatprep.subr.bf16.mxu0 0
      %1428 = vmatpush1.bf16.msra.mxu0 0
      %1429 = vmatprep.subr.bf16.mxu0 0
      %1430 = vmatpush1.bf16.msra.mxu0 0
      %1431 = vmatprep.subr.bf16.mxu0 0
      %1432 = vmatpush1.bf16.msra.mxu0 0
      %1433 = vmatprep.subr.bf16.mxu0 0
      %1434 = vmatpush1.bf16.msra.mxu0 0
      %1435 = vmatprep.subr.bf16.mxu0 0
      %1436 = vmatpush1.bf16.msra.mxu0 0
      %1437 = vmatprep.subr.bf16.mxu0 0
      %1438 = vmatpush1.bf16.msra.mxu0 0
      %1439 = vmatprep.subr.bf16.mxu0 0
      %1440 = vmatpush1.bf16.msra.mxu0 0
      %1441 = vmatprep.subr.bf16.mxu0 %v1419
      %1442 = vmatpush1.bf16.msra.mxu0 %v1416
      %1443 = vmatprep.subr.bf16.mxu0 0
      %1444 = vmatpush2.bf16.msra.mxu0 0
      %1445 = vmatprep.subr.bf16.mxu0 0
      %1446 = vmatpush2.bf16.msra.mxu0 0
      %1447 = vmatprep.subr.bf16.mxu0 0
      %1448 = vmatpush2.bf16.msra.mxu0 0
      %1449 = vmatprep.subr.bf16.mxu0 0
      %1450 = vmatpush2.bf16.msra.mxu0 0
      %1451 = vmatprep.subr.bf16.mxu0 0
      %1452 = vmatpush2.bf16.msra.mxu0 0
      %1453 = vmatprep.subr.bf16.mxu0 0
      %1454 = vmatpush2.bf16.msra.mxu0 0
      %1455 = vmatprep.subr.bf16.mxu0 0
      %1456 = vmatpush2.bf16.msra.mxu0 0
      %1457 = vmatprep.subr.bf16.mxu0 0
      %1458 = vmatpush2.bf16.msra.mxu0 0
      %1459 = vmatprep.mubr.bf16.mxu0 0
      %1460 = vmatmul.mubr.bf16.gmra.mxu0 %v1413
      %v1461 = vpop.f32.mrf.mxu0
      %v1462 = vadd.f32 0.0, %v1461
      %v1463 = vpop.f32.mrf.mxu0
      %v1464 = vadd.f32 0.0, %v1463
      %v1465 = vpop.f32.mrf.mxu0
      %v1466 = vpop.f32.mrf.mxu0
      %1467 = vdwg.mxu0
      %1468 = vmatprep.subr.bf16.mxu0 0
      %1469 = vmatpush1.bf16.msra.mxu0 0
      %1470 = vmatprep.subr.bf16.mxu0 0
      %1471 = vmatpush1.bf16.msra.mxu0 0
      %1472 = vmatprep.subr.bf16.mxu0 0
      %1473 = vmatpush1.bf16.msra.mxu0 0
      %1474 = vmatprep.subr.bf16.mxu0 0
      %1475 = vmatpush1.bf16.msra.mxu0 0
      %1476 = vmatprep.subr.bf16.mxu0 0
      %1477 = vmatpush1.bf16.msra.mxu0 0
      %1478 = vmatprep.subr.bf16.mxu0 0
      %1479 = vmatpush1.bf16.msra.mxu0 0
      %1480 = vmatprep.subr.bf16.mxu0 0
      %1481 = vmatpush1.bf16.msra.mxu0 0
      %1482 = vmatprep.subr.bf16.mxu0 %v1425
      %1483 = vmatpush1.bf16.msra.mxu0 %v1422
      %1484 = vmatprep.subr.bf16.mxu0 0
      %1485 = vmatpush2.bf16.msra.mxu0 0
      %1486 = vmatprep.subr.bf16.mxu0 0
      %1487 = vmatpush2.bf16.msra.mxu0 0
      %1488 = vmatprep.subr.bf16.mxu0 0
      %1489 = vmatpush2.bf16.msra.mxu0 0
      %1490 = vmatprep.subr.bf16.mxu0 0
      %1491 = vmatpush2.bf16.msra.mxu0 0
      %1492 = vmatprep.subr.bf16.mxu0 0
      %1493 = vmatpush2.bf16.msra.mxu0 0
      %1494 = vmatprep.subr.bf16.mxu0 0
      %1495 = vmatpush2.bf16.msra.mxu0 0
      %1496 = vmatprep.subr.bf16.mxu0 0
      %1497 = vmatpush2.bf16.msra.mxu0 0
      %1498 = vmatprep.subr.bf16.mxu0 0
      %1499 = vmatpush2.bf16.msra.mxu0 0
      %1500 = vmatprep.mubr.bf16.mxu0 0
      %1501 = vmatmul.mubr.bf16.gmra.mxu0 %v1413
      %v1502 = vpop.f32.mrf.mxu0
      %v1503 = vadd.f32 0.0, %v1502
      %v1504 = vpop.f32.mrf.mxu0
      %v1505 = vadd.f32 0.0, %v1504
      %v1506 = vpop.f32.mrf.mxu0
      %v1507 = vpop.f32.mrf.mxu0
      %1508 = vdwg.mxu0
      %v1509 = vadd.f32 %v1307, %v1462
      %v1510 = vadd.f32 %v1308, %v1464
      %v1511 = vadd.f32 %v1309, %v1503
      %v1512 = vadd.f32 %v1310, %v1505
      %v1513 = vld [vmem:[%s1] sm:$0x88]
      %v1514 = vld [vmem:[%s1 + $0x8] sm:$0x88]
      %v1517 = vunpack.c.l.b16 %v1513
      %v1518 = vunpack.c.h.b16 %v1513
      %v1519 = vunpack.c.l.b16 %v1514
      %v1520 = vunpack.c.h.b16 %v1514
      %v1521 = vpack.c.b16 %v1517, %v1517
      %v1522 = vpack.c.b16 %v1518, %v1518
      %v1523 = vpack.c.b16 %v1519, %v1519
      %v1524 = vpack.c.b16 %v1520, %v1520
      %v1526 = vpack.i.b16 %v1521, %v1521
      %v1528 = vlaneseq
      %v1529 = vshrl.u32 %v1528, 7
      %v1530 = vsub.s32 3, %v1529
      %v1531 = vrot.slane %v1526, %v1530
      %v1533 = vpack.i.b16 %v1522, %v1522
      %v1535 = vlaneseq
      %v1536 = vshrl.u32 %v1535, 7
      %v1537 = vsub.s32 3, %v1536
      %v1538 = vrot.slane %v1533, %v1537
      %v1540 = vpack.i.b16 %v1523, %v1523
      %v1542 = vlaneseq
      %v1543 = vshrl.u32 %v1542, 7
      %v1544 = vsub.s32 3, %v1543
      %v1545 = vrot.slane %v1540, %v1544
      %v1547 = vpack.i.b16 %v1524, %v1524
      %v1549 = vlaneseq
      %v1550 = vshrl.u32 %v1549, 7
      %v1551 = vsub.s32 3, %v1550
      %v1552 = vrot.slane %v1547, %v1551
      %v1557 = vunpack.c.l.b16 %v1531
      %v1558 = vunpack.c.l.b16 %v1538
      %v1559 = vunpack.c.l.b16 %v1545
      %v1560 = vunpack.c.l.b16 %v1552
      %v1561 = vpack.c.b16 %v1558, %v1557
      %v1562 = vpack.c.b16 %v1560, %v1559
      %1563 = vrot.lane.b32.xlu0 %v1561, 15
      %v1564 = vpop.permute.xlu0 %1563
      %1565 = vrot.lane.b32.xlu0 %v1562, 15
      %v1566 = vpop.permute.xlu0 %1565
      %v1567 = vrot.slane %v1564, 4
      %v1568 = vrot.slane %v1566, 4
      %v1569 = vsel %vm917, %v1567, %v1564
      %v1570 = vsel %vm508, %v1567, %v1568
      %v1571 = vsel %vm917, %v1570, %v1566
      %v1575 = vmul.bf16 %v1311, %v1569
      %v1576 = vmul.bf16 %v1312, %v1571
      %v1577 = vmul.bf16 %v1313, %v1568
      %s1578 = scalar_lea.vmem %s4, 24
      %v1579 = vld [vmem:[%s1578] sm:$0xf]
      %v1583 = vunpack.c.l.b16 %v1575
      %v1584 = vunpack.c.h.b16 %v1575
      %v1585 = vunpack.c.l.b16 %v1576
      %v1586 = vunpack.c.h.b16 %v1576
      %v1587 = vunpack.c.l.b16 %v1577
      %v1588 = vpack.c.b16 %v1583, %v1583
      %v1589 = vpack.c.b16 %v1584, %v1584
      %v1590 = vpack.c.b16 %v1585, %v1585
      %v1591 = vpack.c.b16 %v1586, %v1586
      %v1592 = vpack.c.b16 %v1587, %v1587
      %1593 = vrot.lane.b32.xlu0 %v1588, 113
      %v1594 = vpop.permute.xlu0 %1593
      %1595 = vrot.lane.b32.xlu0 %v1589, 113
      %v1596 = vpop.permute.xlu0 %1595
      %1597 = vrot.lane.b32.xlu0 %v1590, 113
      %v1598 = vpop.permute.xlu0 %1597
      %1599 = vrot.lane.b32.xlu0 %v1591, 113
      %v1600 = vpop.permute.xlu0 %1599
      %1601 = vrot.lane.b32.xlu0 %v1592, 113
      %v1602 = vpop.permute.xlu0 %1601
      %v1603 = vsel %vm882, %v1594, %v1596
      %v1604 = vsel %vm882, %v1596, %v1598
      %v1605 = vsel %vm882, %v1598, %v1600
      %v1606 = vsel %vm882, %v1600, %v1602
      %v1608 = vsel %vm602, %v1579, 0
      %v1611 = vsel %vm606, %v1603, 0
      %v1614 = vsel %vm606, %v1604, 0
      %v1617 = vsel %vm606, %v1605, 0
      %v1620 = vsel %vm606, %v1606, 0
      %1622 = vmatprep.subr.bf16.mxu0 0
      %1623 = vmatpush1.bf16.msra.mxu0 0
      %1624 = vmatprep.subr.bf16.mxu0 0
      %1625 = vmatpush1.bf16.msra.mxu0 0
      %1626 = vmatprep.subr.bf16.mxu0 0
      %1627 = vmatpush1.bf16.msra.mxu0 0
      %1628 = vmatprep.subr.bf16.mxu0 0
      %1629 = vmatpush1.bf16.msra.mxu0 0
      %1630 = vmatprep.subr.bf16.mxu0 0
      %1631 = vmatpush1.bf16.msra.mxu0 0
      %1632 = vmatprep.subr.bf16.mxu0 0
      %1633 = vmatpush1.bf16.msra.mxu0 0
      %1634 = vmatprep.subr.bf16.mxu0 0
      %1635 = vmatpush1.bf16.msra.mxu0 0
      %1636 = vmatprep.subr.bf16.mxu0 %v1614
      %1637 = vmatpush1.bf16.msra.mxu0 %v1611
      %1638 = vmatprep.subr.bf16.mxu0 0
      %1639 = vmatpush2.bf16.msra.mxu0 0
      %1640 = vmatprep.subr.bf16.mxu0 0
      %1641 = vmatpush2.bf16.msra.mxu0 0
      %1642 = vmatprep.subr.bf16.mxu0 0
      %1643 = vmatpush2.bf16.msra.mxu0 0
      %1644 = vmatprep.subr.bf16.mxu0 0
      %1645 = vmatpush2.bf16.msra.mxu0 0
      %1646 = vmatprep.subr.bf16.mxu0 0
      %1647 = vmatpush2.bf16.msra.mxu0 0
      %1648 = vmatprep.subr.bf16.mxu0 0
      %1649 = vmatpush2.bf16.msra.mxu0 0
      %1650 = vmatprep.subr.bf16.mxu0 0
      %1651 = vmatpush2.bf16.msra.mxu0 0
      %1652 = vmatprep.subr.bf16.mxu0 0
      %1653 = vmatpush2.bf16.msra.mxu0 0
      %1654 = vmatprep.mubr.bf16.mxu0 0
      %1655 = vmatmul.mubr.bf16.gmra.mxu0 %v1608
      %v1656 = vpop.f32.mrf.mxu0
      %v1657 = vadd.f32 0.0, %v1656
      %v1658 = vpop.f32.mrf.mxu0
      %v1659 = vadd.f32 0.0, %v1658
      %v1660 = vpop.f32.mrf.mxu0
      %v1661 = vpop.f32.mrf.mxu0
      %1662 = vdwg.mxu0
      %1663 = vmatprep.subr.bf16.mxu0 0
      %1664 = vmatpush1.bf16.msra.mxu0 0
      %1665 = vmatprep.subr.bf16.mxu0 0
      %1666 = vmatpush1.bf16.msra.mxu0 0
      %1667 = vmatprep.subr.bf16.mxu0 0
      %1668 = vmatpush1.bf16.msra.mxu0 0
      %1669 = vmatprep.subr.bf16.mxu0 0
      %1670 = vmatpush1.bf16.msra.mxu0 0
      %1671 = vmatprep.subr.bf16.mxu0 0
      %1672 = vmatpush1.bf16.msra.mxu0 0
      %1673 = vmatprep.subr.bf16.mxu0 0
      %1674 = vmatpush1.bf16.msra.mxu0 0
      %1675 = vmatprep.subr.bf16.mxu0 0
      %1676 = vmatpush1.bf16.msra.mxu0 0
      %1677 = vmatprep.subr.bf16.mxu0 %v1620
      %1678 = vmatpush1.bf16.msra.mxu0 %v1617
      %1679 = vmatprep.subr.bf16.mxu0 0
      %1680 = vmatpush2.bf16.msra.mxu0 0
      %1681 = vmatprep.subr.bf16.mxu0 0
      %1682 = vmatpush2.bf16.msra.mxu0 0
      %1683 = vmatprep.subr.bf16.mxu0 0
      %1684 = vmatpush2.bf16.msra.mxu0 0
      %1685 = vmatprep.subr.bf16.mxu0 0
      %1686 = vmatpush2.bf16.msra.mxu0 0
      %1687 = vmatprep.subr.bf16.mxu0 0
      %1688 = vmatpush2.bf16.msra.mxu0 0
      %1689 = vmatprep.subr.bf16.mxu0 0
      %1690 = vmatpush2.bf16.msra.mxu0 0
      %1691 = vmatprep.subr.bf16.mxu0 0
      %1692 = vmatpush2.bf16.msra.mxu0 0
      %1693 = vmatprep.subr.bf16.mxu0 0
      %1694 = vmatpush2.bf16.msra.mxu0 0
      %1695 = vmatprep.mubr.bf16.mxu0 0
      %1696 = vmatmul.mubr.bf16.gmra.mxu0 %v1608
      %v1697 = vpop.f32.mrf.mxu0
      %v1698 = vadd.f32 0.0, %v1697
      %v1699 = vpop.f32.mrf.mxu0
      %v1700 = vadd.f32 0.0, %v1699
      %v1701 = vpop.f32.mrf.mxu0
      %v1702 = vpop.f32.mrf.mxu0
      %1703 = vdwg.mxu0
      %v1704 = vadd.f32 %v1509, %v1657
      %v1705 = vadd.f32 %v1510, %v1659
      %v1706 = vadd.f32 %v1511, %v1698
      %v1707 = vadd.f32 %v1512, %v1700
      %v1708 = vshrl.u32 %v1521, 16
      %v1709 = vpack.i.b16 %v1708, %v1708
      %v1711 = vlaneseq
      %v1712 = vshrl.u32 %v1711, 7
      %v1713 = vsub.s32 3, %v1712
      %v1714 = vrot.slane %v1709, %v1713
      %v1715 = vshrl.u32 %v1522, 16
      %v1716 = vpack.i.b16 %v1715, %v1715
      %v1718 = vlaneseq
      %v1719 = vshrl.u32 %v1718, 7
      %v1720 = vsub.s32 3, %v1719
      %v1721 = vrot.slane %v1716, %v1720
      %v1722 = vshrl.u32 %v1523, 16
      %v1723 = vpack.i.b16 %v1722, %v1722
      %v1725 = vlaneseq
      %v1726 = vshrl.u32 %v1725, 7
      %v1727 = vsub.s32 3, %v1726
      %v1728 = vrot.slane %v1723, %v1727
      %v1729 = vshrl.u32 %v1524, 16
      %v1730 = vpack.i.b16 %v1729, %v1729
      %v1732 = vlaneseq
      %v1733 = vshrl.u32 %v1732, 7
      %v1734 = vsub.s32 3, %v1733
      %v1735 = vrot.slane %v1730, %v1734
      %v1740 = vunpack.c.l.b16 %v1714
      %v1741 = vunpack.c.l.b16 %v1721
      %v1742 = vunpack.c.l.b16 %v1728
      %v1743 = vunpack.c.l.b16 %v1735
      %v1744 = vpack.c.b16 %v1741, %v1740
      %v1745 = vpack.c.b16 %v1743, %v1742
      %1746 = vrot.lane.b32.xlu0 %v1744, 16
      %v1747 = vpop.permute.xlu0 %1746
      %1748 = vrot.lane.b32.xlu0 %v1745, 16
      %v1749 = vpop.permute.xlu0 %1748
      %v1750 = vrot.slane %v1747, 4
      %v1751 = vrot.slane %v1749, 4
      %v1752 = vsel %vm597, %v1750, %v1747
      %v1753 = vsel %vm508, %v1750, %v1751
      %v1754 = vsel %vm597, %v1753, %v1749
      %v1758 = vmul.bf16 %v1311, %v1752
      %v1759 = vmul.bf16 %v1312, %v1754
      %v1760 = vmul.bf16 %v1313, %v1751
      %s1761 = scalar_lea.vmem %s4, 28
      %v1762 = vld [vmem:[%s1761] sm:$0xf]
      %v1766 = vunpack.c.l.b16 %v1758
      %v1767 = vunpack.c.h.b16 %v1758
      %v1768 = vunpack.c.l.b16 %v1759
      %v1769 = vunpack.c.h.b16 %v1759
      %v1770 = vunpack.c.l.b16 %v1760
      %v1771 = vpack.c.b16 %v1766, %v1766
      %v1772 = vpack.c.b16 %v1767, %v1767
      %v1773 = vpack.c.b16 %v1768, %v1768
      %v1774 = vpack.c.b16 %v1769, %v1769
      %v1775 = vpack.c.b16 %v1770, %v1770
      %1776 = vrot.lane.b32.xlu0 %v1771, 112
      %v1777 = vpop.permute.xlu0 %1776
      %1778 = vrot.lane.b32.xlu0 %v1772, 112
      %v1779 = vpop.permute.xlu0 %1778
      %1780 = vrot.lane.b32.xlu0 %v1773, 112
      %v1781 = vpop.permute.xlu0 %1780
      %1782 = vrot.lane.b32.xlu0 %v1774, 112
      %v1783 = vpop.permute.xlu0 %1782
      %1784 = vrot.lane.b32.xlu0 %v1775, 112
      %v1785 = vpop.permute.xlu0 %1784
      %v1786 = vsel %vm562, %v1777, %v1779
      %v1787 = vsel %vm562, %v1779, %v1781
      %v1788 = vsel %vm562, %v1781, %v1783
      %v1789 = vsel %vm562, %v1783, %v1785
      %v1791 = vsel %vm602, %v1762, 0
      %v1794 = vsel %vm606, %v1786, 0
      %v1797 = vsel %vm606, %v1787, 0
      %v1800 = vsel %vm606, %v1788, 0
      %v1803 = vsel %vm606, %v1789, 0
      %1805 = vmatprep.subr.bf16.mxu0 0
      %1806 = vmatpush1.bf16.msra.mxu0 0
      %1807 = vmatprep.subr.bf16.mxu0 0
      %1808 = vmatpush1.bf16.msra.mxu0 0
      %1809 = vmatprep.subr.bf16.mxu0 0
      %1810 = vmatpush1.bf16.msra.mxu0 0
      %1811 = vmatprep.subr.bf16.mxu0 0
      %1812 = vmatpush1.bf16.msra.mxu0 0
      %1813 = vmatprep.subr.bf16.mxu0 0
      %1814 = vmatpush1.bf16.msra.mxu0 0
      %1815 = vmatprep.subr.bf16.mxu0 0
      %1816 = vmatpush1.bf16.msra.mxu0 0
      %1817 = vmatprep.subr.bf16.mxu0 0
      %1818 = vmatpush1.bf16.msra.mxu0 0
      %1819 = vmatprep.subr.bf16.mxu0 %v1797
      %1820 = vmatpush1.bf16.msra.mxu0 %v1794
      %1821 = vmatprep.subr.bf16.mxu0 0
      %1822 = vmatpush2.bf16.msra.mxu0 0
      %1823 = vmatprep.subr.bf16.mxu0 0
      %1824 = vmatpush2.bf16.msra.mxu0 0
      %1825 = vmatprep.subr.bf16.mxu0 0
      %1826 = vmatpush2.bf16.msra.mxu0 0
      %1827 = vmatprep.subr.bf16.mxu0 0
      %1828 = vmatpush2.bf16.msra.mxu0 0
      %1829 = vmatprep.subr.bf16.mxu0 0
      %1830 = vmatpush2.bf16.msra.mxu0 0
      %1831 = vmatprep.subr.bf16.mxu0 0
      %1832 = vmatpush2.bf16.msra.mxu0 0
      %1833 = vmatprep.subr.bf16.mxu0 0
      %1834 = vmatpush2.bf16.msra.mxu0 0
      %1835 = vmatprep.subr.bf16.mxu0 0
      %1836 = vmatpush2.bf16.msra.mxu0 0
      %1837 = vmatprep.mubr.bf16.mxu0 0
      %1838 = vmatmul.mubr.bf16.gmra.mxu0 %v1791
      %v1839 = vpop.f32.mrf.mxu0
      %v1840 = vadd.f32 0.0, %v1839
      %v1841 = vpop.f32.mrf.mxu0
      %v1842 = vadd.f32 0.0, %v1841
      %v1843 = vpop.f32.mrf.mxu0
      %v1844 = vpop.f32.mrf.mxu0
      %1845 = vdwg.mxu0
      %1846 = vmatprep.subr.bf16.mxu0 0
      %1847 = vmatpush1.bf16.msra.mxu0 0
      %1848 = vmatprep.subr.bf16.mxu0 0
      %1849 = vmatpush1.bf16.msra.mxu0 0
      %1850 = vmatprep.subr.bf16.mxu0 0
      %1851 = vmatpush1.bf16.msra.mxu0 0
      %1852 = vmatprep.subr.bf16.mxu0 0
      %1853 = vmatpush1.bf16.msra.mxu0 0
      %1854 = vmatprep.subr.bf16.mxu0 0
      %1855 = vmatpush1.bf16.msra.mxu0 0
      %1856 = vmatprep.subr.bf16.mxu0 0
      %1857 = vmatpush1.bf16.msra.mxu0 0
      %1858 = vmatprep.subr.bf16.mxu0 0
      %1859 = vmatpush1.bf16.msra.mxu0 0
      %1860 = vmatprep.subr.bf16.mxu0 %v1803
      %1861 = vmatpush1.bf16.msra.mxu0 %v1800
      %1862 = vmatprep.subr.bf16.mxu0 0
      %1863 = vmatpush2.bf16.msra.mxu0 0
      %1864 = vmatprep.subr.bf16.mxu0 0
      %1865 = vmatpush2.bf16.msra.mxu0 0
      %1866 = vmatprep.subr.bf16.mxu0 0
      %1867 = vmatpush2.bf16.msra.mxu0 0
      %1868 = vmatprep.subr.bf16.mxu0 0
      %1869 = vmatpush2.bf16.msra.mxu0 0
      %1870 = vmatprep.subr.bf16.mxu0 0
      %1871 = vmatpush2.bf16.msra.mxu0 0
      %1872 = vmatprep.subr.bf16.mxu0 0
      %1873 = vmatpush2.bf16.msra.mxu0 0
      %1874 = vmatprep.subr.bf16.mxu0 0
      %1875 = vmatpush2.bf16.msra.mxu0 0
      %1876 = vmatprep.subr.bf16.mxu0 0
      %1877 = vmatpush2.bf16.msra.mxu0 0
      %1878 = vmatprep.mubr.bf16.mxu0 0
      %1879 = vmatmul.mubr.bf16.gmra.mxu0 %v1791
      %v1880 = vpop.f32.mrf.mxu0
      %v1881 = vadd.f32 0.0, %v1880
      %v1882 = vpop.f32.mrf.mxu0
      %v1883 = vadd.f32 0.0, %v1882
      %v1884 = vpop.f32.mrf.mxu0
      %v1885 = vpop.f32.mrf.mxu0
      %1886 = vdwg.mxu0
      %v1887 = vadd.f32 %v1704, %v1840
      %v1888 = vadd.f32 %v1705, %v1842
      %v1889 = vadd.f32 %v1706, %v1881
      %v1890 = vadd.f32 %v1707, %v1883
      %v1891 = vld [vmem:[%s1 + $0x10] sm:$0x11]
      %v1892 = vld [vmem:[%s1 + $0x18] sm:$0x11]
      %v1895 = vunpack.c.l.b16 %v1891
      %v1896 = vunpack.c.h.b16 %v1891
      %v1897 = vunpack.c.l.b16 %v1892
      %v1898 = vunpack.c.h.b16 %v1892
      %v1899 = vpack.c.b16 %v1895, %v1895
      %v1900 = vpack.c.b16 %v1896, %v1896
      %v1901 = vpack.c.b16 %v1897, %v1897
      %v1902 = vpack.c.b16 %v1898, %v1898
      %v1904 = vpack.i.b16 %v1899, %v1899
      %v1906 = vlaneseq
      %v1907 = vshrl.u32 %v1906, 7
      %v1908 = vsub.s32 0, %v1907
      %v1909 = vrot.slane %v1904, %v1908
      %v1911 = vpack.i.b16 %v1900, %v1900
      %v1913 = vlaneseq
      %v1914 = vshrl.u32 %v1913, 7
      %v1915 = vsub.s32 0, %v1914
      %v1916 = vrot.slane %v1911, %v1915
      %v1918 = vpack.i.b16 %v1901, %v1901
      %v1920 = vlaneseq
      %v1921 = vshrl.u32 %v1920, 7
      %v1922 = vsub.s32 0, %v1921
      %v1923 = vrot.slane %v1918, %v1922
      %v1925 = vpack.i.b16 %v1902, %v1902
      %v1927 = vlaneseq
      %v1928 = vshrl.u32 %v1927, 7
      %v1929 = vsub.s32 0, %v1928
      %v1930 = vrot.slane %v1925, %v1929
      %v1935 = vunpack.c.l.b16 %v1909
      %v1936 = vunpack.c.l.b16 %v1916
      %v1937 = vunpack.c.l.b16 %v1923
      %v1938 = vunpack.c.l.b16 %v1930
      %v1939 = vpack.c.b16 %v1936, %v1935
      %v1940 = vpack.c.b16 %v1938, %v1937
      %1941 = vrot.lane.b32.xlu0 %v1939, 17
      %v1942 = vpop.permute.xlu0 %1941
      %1943 = vrot.lane.b32.xlu0 %v1940, 17
      %v1944 = vpop.permute.xlu0 %1943
      %v1945 = vrot.slane %v1942, 4
      %v1946 = vrot.slane %v1944, 4
      %v1947 = vsel %vm724, %v1945, %v1942
      %v1948 = vsel %vm508, %v1945, %v1946
      %v1949 = vsel %vm724, %v1948, %v1944
      %v1953 = vmul.bf16 %v1311, %v1947
      %v1954 = vmul.bf16 %v1312, %v1949
      %v1955 = vmul.bf16 %v1313, %v1946
      %s1956 = scalar_lea.vmem %s4, 32
      %v1957 = vld [vmem:[%s1956] sm:$0xf]
      %v1961 = vunpack.c.l.b16 %v1953
      %v1962 = vunpack.c.h.b16 %v1953
      %v1963 = vunpack.c.l.b16 %v1954
      %v1964 = vunpack.c.h.b16 %v1954
      %v1965 = vunpack.c.l.b16 %v1955
      %v1966 = vpack.c.b16 %v1961, %v1961
      %v1967 = vpack.c.b16 %v1962, %v1962
      %v1968 = vpack.c.b16 %v1963, %v1963
      %v1969 = vpack.c.b16 %v1964, %v1964
      %v1970 = vpack.c.b16 %v1965, %v1965
      %1971 = vrot.lane.b32.xlu0 %v1966, 111
      %v1972 = vpop.permute.xlu0 %1971
      %1973 = vrot.lane.b32.xlu0 %v1967, 111
      %v1974 = vpop.permute.xlu0 %1973
      %1975 = vrot.lane.b32.xlu0 %v1968, 111
      %v1976 = vpop.permute.xlu0 %1975
      %1977 = vrot.lane.b32.xlu0 %v1969, 111
      %v1978 = vpop.permute.xlu0 %1977
      %1979 = vrot.lane.b32.xlu0 %v1970, 111
      %v1980 = vpop.permute.xlu0 %1979
      %v1981 = vsel %vm506, %v1972, %v1974
      %v1982 = vsel %vm506, %v1974, %v1976
      %v1983 = vsel %vm506, %v1976, %v1978
      %v1984 = vsel %vm506, %v1978, %v1980
      %v1986 = vsel %vm602, %v1957, 0
      %v1989 = vsel %vm606, %v1981, 0
      %v1992 = vsel %vm606, %v1982, 0
      %v1995 = vsel %vm606, %v1983, 0
      %v1998 = vsel %vm606, %v1984, 0
      %2000 = vmatprep.subr.bf16.mxu0 0
      %2001 = vmatpush1.bf16.msra.mxu0 0
      %2002 = vmatprep.subr.bf16.mxu0 0
      %2003 = vmatpush1.bf16.msra.mxu0 0
      %2004 = vmatprep.subr.bf16.mxu0 0
      %2005 = vmatpush1.bf16.msra.mxu0 0
      %2006 = vmatprep.subr.bf16.mxu0 0
      %2007 = vmatpush1.bf16.msra.mxu0 0
      %2008 = vmatprep.subr.bf16.mxu0 0
      %2009 = vmatpush1.bf16.msra.mxu0 0
      %2010 = vmatprep.subr.bf16.mxu0 0
      %2011 = vmatpush1.bf16.msra.mxu0 0
      %2012 = vmatprep.subr.bf16.mxu0 0
      %2013 = vmatpush1.bf16.msra.mxu0 0
      %2014 = vmatprep.subr.bf16.mxu0 %v1992
      %2015 = vmatpush1.bf16.msra.mxu0 %v1989
      %2016 = vmatprep.subr.bf16.mxu0 0
      %2017 = vmatpush2.bf16.msra.mxu0 0
      %2018 = vmatprep.subr.bf16.mxu0 0
      %2019 = vmatpush2.bf16.msra.mxu0 0
      %2020 = vmatprep.subr.bf16.mxu0 0
      %2021 = vmatpush2.bf16.msra.mxu0 0
      %2022 = vmatprep.subr.bf16.mxu0 0
      %2023 = vmatpush2.bf16.msra.mxu0 0
      %2024 = vmatprep.subr.bf16.mxu0 0
      %2025 = vmatpush2.bf16.msra.mxu0 0
      %2026 = vmatprep.subr.bf16.mxu0 0
      %2027 = vmatpush2.bf16.msra.mxu0 0
      %2028 = vmatprep.subr.bf16.mxu0 0
      %2029 = vmatpush2.bf16.msra.mxu0 0
      %2030 = vmatprep.subr.bf16.mxu0 0
      %2031 = vmatpush2.bf16.msra.mxu0 0
      %2032 = vmatprep.mubr.bf16.mxu0 0
      %2033 = vmatmul.mubr.bf16.gmra.mxu0 %v1986
      %v2034 = vpop.f32.mrf.mxu0
      %v2035 = vadd.f32 0.0, %v2034
      %v2036 = vpop.f32.mrf.mxu0
      %v2037 = vadd.f32 0.0, %v2036
      %v2038 = vpop.f32.mrf.mxu0
      %v2039 = vpop.f32.mrf.mxu0
      %2040 = vdwg.mxu0
      %2041 = vmatprep.subr.bf16.mxu0 0
      %2042 = vmatpush1.bf16.msra.mxu0 0
      %2043 = vmatprep.subr.bf16.mxu0 0
      %2044 = vmatpush1.bf16.msra.mxu0 0
      %2045 = vmatprep.subr.bf16.mxu0 0
      %2046 = vmatpush1.bf16.msra.mxu0 0
      %2047 = vmatprep.subr.bf16.mxu0 0
      %2048 = vmatpush1.bf16.msra.mxu0 0
      %2049 = vmatprep.subr.bf16.mxu0 0
      %2050 = vmatpush1.bf16.msra.mxu0 0
      %2051 = vmatprep.subr.bf16.mxu0 0
      %2052 = vmatpush1.bf16.msra.mxu0 0
      %2053 = vmatprep.subr.bf16.mxu0 0
      %2054 = vmatpush1.bf16.msra.mxu0 0
      %2055 = vmatprep.subr.bf16.mxu0 %v1998
      %2056 = vmatpush1.bf16.msra.mxu0 %v1995
      %2057 = vmatprep.subr.bf16.mxu0 0
      %2058 = vmatpush2.bf16.msra.mxu0 0
      %2059 = vmatprep.subr.bf16.mxu0 0
      %2060 = vmatpush2.bf16.msra.mxu0 0
      %2061 = vmatprep.subr.bf16.mxu0 0
      %2062 = vmatpush2.bf16.msra.mxu0 0
      %2063 = vmatprep.subr.bf16.mxu0 0
      %2064 = vmatpush2.bf16.msra.mxu0 0
      %2065 = vmatprep.subr.bf16.mxu0 0
      %2066 = vmatpush2.bf16.msra.mxu0 0
      %2067 = vmatprep.subr.bf16.mxu0 0
      %2068 = vmatpush2.bf16.msra.mxu0 0
      %2069 = vmatprep.subr.bf16.mxu0 0
      %2070 = vmatpush2.bf16.msra.mxu0 0
      %2071 = vmatprep.subr.bf16.mxu0 0
      %2072 = vmatpush2.bf16.msra.mxu0 0
      %2073 = vmatprep.mubr.bf16.mxu0 0
      %2074 = vmatmul.mubr.bf16.gmra.mxu0 %v1986
      %v2075 = vpop.f32.mrf.mxu0
      %v2076 = vadd.f32 0.0, %v2075
      %v2077 = vpop.f32.mrf.mxu0
      %v2078 = vadd.f32 0.0, %v2077
      %v2079 = vpop.f32.mrf.mxu0
      %v2080 = vpop.f32.mrf.mxu0
      %2081 = vdwg.mxu0
      %v2082 = vadd.f32 %v1887, %v2035
      %v2083 = vadd.f32 %v1888, %v2037
      %v2084 = vadd.f32 %v1889, %v2076
      %v2085 = vadd.f32 %v1890, %v2078
      %v2086 = vld [vmem:[%s5] sm:$0xff]
      %2088 = vset.pattern.permute.xlu0 0
      %2089 = vperm.xlu0 %2088, %v2086
      %v2090 = vpop.permute.xlu0 %2089
      %v2092 = vadd.f32 %v2082, %v2090
      %v2093 = vadd.f32 %v2083, %v2090
      %v2094 = vadd.f32 %v2084, %v2090
      %v2095 = vadd.f32 %v2085, %v2090
      %v2096 = vmax.f32 %v2092, 0.0
      %v2097 = vmax.f32 %v2093, 0.0
      %v2098 = vmax.f32 %v2094, 0.0
      %v2099 = vmax.f32 %v2095, 0.0
      %v2100 = vld [vmem:[%s6] sm:$0xf]
      %v2101 = vld [vmem:[%s6 + $0x4] sm:$0xf]
      %v2102 = vpack.c.bf16 %v2096, %v2096
      %v2103 = vpack.c.bf16 %v2097, %v2097
      %v2104 = vpack.c.bf16 %v2098, %v2098
      %v2105 = vpack.c.bf16 %v2099, %v2099
      %v2106 = vld [vmem:[%s7] sm:$0xff]
      %v2107 = vld [vmem:[%s7 + $0x8] sm:$0xff]
      %2109 = vset.pattern.permute.xlu0 0
      %2110 = vperm.xlu0 %2109, %v2106
      %v2111 = vpop.permute.xlu0 %2110
      %2114 = vset.pattern.permute.xlu0 0
      %2115 = vperm.xlu0 %2114, %v2107
      %v2116 = vpop.permute.xlu0 %2115
      %v2120 = vunpack.c.l.b16 %v2100
      %v2121 = vunpack.c.l.b16 %v2101
      %v2122 = vpack.c.b16 %v2121, %v2120
      %v2124 = vsel %vm602, %v2122, 0
      %v2127 = vsel %vm606, %v2102, 0
      %v2130 = vsel %vm606, %v2103, 0
      %v2133 = vsel %vm606, %v2104, 0
      %v2136 = vsel %vm606, %v2105, 0
      %2138 = vmatprep.subr.bf16.mxu0 0
      %2139 = vmatpush1.bf16.msra.mxu0 0
      %2140 = vmatprep.subr.bf16.mxu0 0
      %2141 = vmatpush1.bf16.msra.mxu0 0
      %2142 = vmatprep.subr.bf16.mxu0 0
      %2143 = vmatpush1.bf16.msra.mxu0 0
      %2144 = vmatprep.subr.bf16.mxu0 0
      %2145 = vmatpush1.bf16.msra.mxu0 0
      %2146 = vmatprep.subr.bf16.mxu0 0
      %2147 = vmatpush1.bf16.msra.mxu0 0
      %2148 = vmatprep.subr.bf16.mxu0 0
      %2149 = vmatpush1.bf16.msra.mxu0 0
      %2150 = vmatprep.subr.bf16.mxu0 0
      %2151 = vmatpush1.bf16.msra.mxu0 0
      %2152 = vmatprep.subr.bf16.mxu0 %v2130
      %2153 = vmatpush1.bf16.msra.mxu0 %v2127
      %2154 = vmatprep.subr.bf16.mxu0 0
      %2155 = vmatpush2.bf16.msra.mxu0 0
      %2156 = vmatprep.subr.bf16.mxu0 0
      %2157 = vmatpush2.bf16.msra.mxu0 0
      %2158 = vmatprep.subr.bf16.mxu0 0
      %2159 = vmatpush2.bf16.msra.mxu0 0
      %2160 = vmatprep.subr.bf16.mxu0 0
      %2161 = vmatpush2.bf16.msra.mxu0 0
      %2162 = vmatprep.subr.bf16.mxu0 0
      %2163 = vmatpush2.bf16.msra.mxu0 0
      %2164 = vmatprep.subr.bf16.mxu0 0
      %2165 = vmatpush2.bf16.msra.mxu0 0
      %2166 = vmatprep.subr.bf16.mxu0 0
      %2167 = vmatpush2.bf16.msra.mxu0 0
      %2168 = vmatprep.subr.bf16.mxu0 0
      %2169 = vmatpush2.bf16.msra.mxu0 0
      %2170 = vmatprep.mubr.bf16.mxu0 0
      %2171 = vmatmul.mubr.bf16.gmra.mxu0 %v2124
      %v2172 = vpop.f32.mrf.mxu0
      %v2173 = vadd.f32 %v2111, %v2172
      %v2174 = vpop.f32.mrf.mxu0
      %v2175 = vadd.f32 %v2111, %v2174
      %v2176 = vpop.f32.mrf.mxu0
      %v2177 = vadd.f32 %v2116, %v2176
      %v2178 = vpop.f32.mrf.mxu0
      %v2179 = vadd.f32 %v2116, %v2178
      %2180 = vdwg.mxu0
      %2181 = vmatprep.subr.bf16.mxu0 0
      %2182 = vmatpush1.bf16.msra.mxu0 0
      %2183 = vmatprep.subr.bf16.mxu0 0
      %2184 = vmatpush1.bf16.msra.mxu0 0
      %2185 = vmatprep.subr.bf16.mxu0 0
      %2186 = vmatpush1.bf16.msra.mxu0 0
      %2187 = vmatprep.subr.bf16.mxu0 0
      %2188 = vmatpush1.bf16.msra.mxu0 0
      %2189 = vmatprep.subr.bf16.mxu0 0
      %2190 = vmatpush1.bf16.msra.mxu0 0
      %2191 = vmatprep.subr.bf16.mxu0 0
      %2192 = vmatpush1.bf16.msra.mxu0 0
      %2193 = vmatprep.subr.bf16.mxu0 0
      %2194 = vmatpush1.bf16.msra.mxu0 0
      %2195 = vmatprep.subr.bf16.mxu0 %v2136
      %2196 = vmatpush1.bf16.msra.mxu0 %v2133
      %2197 = vmatprep.subr.bf16.mxu0 0
      %2198 = vmatpush2.bf16.msra.mxu0 0
      %2199 = vmatprep.subr.bf16.mxu0 0
      %2200 = vmatpush2.bf16.msra.mxu0 0
      %2201 = vmatprep.subr.bf16.mxu0 0
      %2202 = vmatpush2.bf16.msra.mxu0 0
      %2203 = vmatprep.subr.bf16.mxu0 0
      %2204 = vmatpush2.bf16.msra.mxu0 0
      %2205 = vmatprep.subr.bf16.mxu0 0
      %2206 = vmatpush2.bf16.msra.mxu0 0
      %2207 = vmatprep.subr.bf16.mxu0 0
      %2208 = vmatpush2.bf16.msra.mxu0 0
      %2209 = vmatprep.subr.bf16.mxu0 0
      %2210 = vmatpush2.bf16.msra.mxu0 0
      %2211 = vmatprep.subr.bf16.mxu0 0
      %2212 = vmatpush2.bf16.msra.mxu0 0
      %2213 = vmatprep.mubr.bf16.mxu0 0
      %2214 = vmatmul.mubr.bf16.gmra.mxu0 %v2124
      %v2215 = vpop.f32.mrf.mxu0
      %v2216 = vadd.f32 %v2111, %v2215
      %v2217 = vpop.f32.mrf.mxu0
      %v2218 = vadd.f32 %v2111, %v2217
      %v2219 = vpop.f32.mrf.mxu0
      %v2220 = vadd.f32 %v2116, %v2219
      %v2221 = vpop.f32.mrf.mxu0
      %v2222 = vadd.f32 %v2116, %v2221
      %2223 = vdwg.mxu0
      %v2224 = vadd.f32 %v2173, %v315
      %v2225 = vadd.f32 %v2175, %v316
      %v2226 = vadd.f32 %v2216, %v320
      %v2227 = vadd.f32 %v2218, %v321
      %v2228 = vadd.f32 %v2177, %v317
      %v2229 = vadd.f32 %v2179, %v318
      %v2230 = vadd.f32 %v2220, %v322
      %v2231 = vadd.f32 %v2222, %v323
      %v2232 = vmax.f32 %v2224, 0.0
      %v2233 = vmax.f32 %v2225, 0.0
      %v2234 = vmax.f32 %v2226, 0.0
      %v2235 = vmax.f32 %v2227, 0.0
      %v2236 = vmax.f32 %v2228, 0.0
      %v2237 = vmax.f32 %v2229, 0.0
      %v2238 = vmax.f32 %v2230, 0.0
      %v2239 = vmax.f32 %v2231, 0.0
      %2240 = vst [vmem:[%s312] sm:$0xff] %v2232
      %2241 = vst [vmem:[%s312 + $0x8] sm:$0xff] %v2233
      %2242 = vst [vmem:[%s312 + $0x10] sm:$0xff] %v2236
      %2243 = vst [vmem:[%s312 + $0x18] sm:$0xff] %v2237
      %s2244 = scalar_lea.vmem %s312, 32
      %2245 = vst [vmem:[%s2244] sm:$0xff] %v2234
      %2246 = vst [vmem:[%s2244 + $0x8] sm:$0xff] %v2235
      %2247 = vst [vmem:[%s2244 + $0x10] sm:$0xff] %v2238
      %2248 = vst [vmem:[%s2244 + $0x18] sm:$0xff] %v2239
      %s2249 = smul.u32 2, %s19
      %p2250 = scmp.lt.s32.totalorder %s2249, 3
      %s2251 = scalar_select %p2250, %s2249, 3
      %s2252 = smul.addr %s2251, 4
      %s2253 = smul.addr %s2252, 8
      %s2254 = scalar_lea.vmem %s8, %s2253
      // Predicated region
      $region53: #{group_bottleneck_forward.1} parent=51 // pred_check
        %p2255 = pneg %p210
      $region54: #{group_bottleneck_forward.1} parent=51 // pred_check_branch
        %2257 = sbr.rel (%p2255) target = $region56
      $region55: #{group_bottleneck_forward.1} parent=51 // pred_region
        %s2258 = smul.u32 2, %s19
      $region56: #{group_bottleneck_forward.1} parent=51 // pred_fallthru
        _
    $region52: #{group_bottleneck_forward.1} parent=5 // pred_fallthru
      _
    %p2259 = scmp.le.s32.totalorder 2, %s14
    // Predicated region
    $region57: #{group_bottleneck_forward.1} parent=5 // pred_check
      %p2260 = pneg %p2259
    $region58: #{group_bottleneck_forward.1} parent=5 // pred_check_branch
      %2262 = sbr.rel (%p2260) target = $region60
    $region59: #{group_bottleneck_forward.1} parent=5 // pred_region
      %s2263 = ssub.s32 %s14, 2
      // Predicated region
      $region61: #{group_bottleneck_forward.1} parent=59 // pred_check
        %p2264 = pneg %p216
      $region62: #{group_bottleneck_forward.1} parent=59 // pred_check_branch
        %2266 = sbr.rel (%p2264) target = $region64
      $region63: #{group_bottleneck_forward.1} parent=59 // pred_region
        %s2267 = smul.u32 2, %s20
        %p2268 = scmp.lt.s32.totalorder %s2267, 3
        %s2269 = scalar_select %p2268, %s2267, 3
        %s2270 = smul.addr %s2269, 4
        %s2271 = smul.addr %s2270, 8
        %s2272 = scalar_lea.vmem %s8, %s2271
      $region64: #{group_bottleneck_forward.1} parent=59 // pred_fallthru
        _
    $region60: #{group_bottleneck_forward.1} parent=5 // pred_fallthru
      _
  $region6: #{group_bottleneck_forward.1} parent=0 // loop_footer
    %s18 = sadd.s32 1, %s14
  $region7: #{group_bottleneck_forward.1} parent=0 // loop_footer_branch
    %13 = sbr.rel target = $region3
  $region8: #{group_bottleneck_forward.1} parent=0 // loop_exit
    _

</llo_original>
